<compile_context>
chip_gen: v5e
topology: v5e:2x2
jax: 0.10.0
libtpu: 0.0.40
codegen_flags: <defaults>
</compile_context>

<pallas_src>
import functools

import jax
import jax.numpy as jnp
from jax.experimental import pallas as pl
from jax.experimental.pallas import tpu as pltpu

LATENT_DIM = 100
_LANE_TARGET = 2048  # target batch*spatial lane width per conv grid step


# --------------------------------------------------------------------------
# fc: fused matmul + bias kernel (row-tiled, bf16 MXU operands, f32 epilogue)
# --------------------------------------------------------------------------
def _fc_kernel(z_ref, w_ref, b_ref, o_ref):
    y = jnp.dot(z_ref[...], w_ref[...], preferred_element_type=jnp.float32)
    o_ref[...] = (y + b_ref[...]).astype(o_ref.dtype)


def linear(z, w_t, bias, out_dtype=jnp.float32):
    """y = z @ w_t + bias ; z:(B,K), w_t:(K,N) pre-transposed -> (B,N)."""
    B, K = z.shape
    N = w_t.shape[1]
    TM = B if B <= 512 else 256
    Bp = -(-B // TM) * TM
    if Bp != B:
        z = jnp.pad(z, ((0, Bp - B), (0, 0)))
    out = pl.pallas_call(
        _fc_kernel,
        out_shape=jax.ShapeDtypeStruct((Bp, N), out_dtype),
        grid=(Bp // TM,),
        in_specs=[
            pl.BlockSpec((TM, K), lambda i: (i, 0)),
            pl.BlockSpec((K, N), lambda i: (0, 0)),
            pl.BlockSpec((1, N), lambda i: (0, 0)),
        ],
        out_specs=pl.BlockSpec((TM, N), lambda i: (i, 0)),
        compiler_params=pltpu.CompilerParams(dimension_semantics=("parallel",)),
    )(z.astype(jnp.bfloat16), w_t.astype(jnp.bfloat16),
      bias.reshape(1, N).astype(jnp.float32))
    return out[:B]


# --------------------------------------------------------------------------
# Sub-pixel ConvTranspose2d(k=4, s=2, p=1) kernel.
#
#   y[b, oc, 2*qy+py, 2*qx+px] =
#       bias[oc] + sum_{ic, dy, dx in {0,1}}
#           x[b, ic, qy+py+dy-1, qx+px+dx-1] * w[ic, oc, 3-py-2dy, 3-px-2dx]
#
# Per output phase (py,px) the 4 taps are stacked along the contraction dim:
#   (Cout, 4*Cin) @ (4*Cin, TB*H*W)  -> f32 accumulate -> bias + activation.
# Lane axis of every matmul / store is batch*spatial (lane-dense).
# --------------------------------------------------------------------------
def _convt_kernel(xs_ref, w_ref, b_ref, o_ref, *, act):
    bias = b_ref[...]                                        # (Cout, 1) f32
    for py in range(2):
        for px in range(2):
            y = jnp.dot(w_ref[py, px], xs_ref[0, py, px],    # (Cout,4Cin)@(4Cin,S)
                        preferred_element_type=jnp.float32) + bias
            if act == "relu":
                y = jnp.maximum(y, 0.0)
            elif act == "sigmoid":
                y = 1.0 / (1.0 + jnp.exp(-y))
            o_ref[0, py, px] = y.astype(o_ref.dtype)


def _pack_convt_weights(w):
    """w:(Cin,Cout,4,4) -> (2,2,Cout,4*Cin) indexed [py, px, oc, (dy,dx,ic)]."""
    cin, cout = w.shape[0], w.shape[1]
    phases = []
    for py in range(2):
        for px in range(2):
            taps = [w[:, :, 3 - py - 2 * dy, 3 - px - 2 * dx].T   # (Cout, Cin)
                    for dy in range(2) for dx in range(2)]
            phases.append(jnp.concatenate(taps, axis=1))          # (Cout, 4*Cin)
    return jnp.stack(phases, axis=0).reshape(2, 2, cout, 4 * cin)


def conv_transpose_subpixel(x_nchw, weight, bias, act, out_dtype=jnp.float32):
    """ConvTranspose2d(Cin,Cout,4,2,1) + activation, NCHW in/out."""
    B, Cin, H, W = x_nchw.shape
    Cout = weight.shape[1]

    TB = max(1, min(B, _LANE_TARGET // (H * W)))          # batch per grid step
    NT = -(-B // TB)
    Bp = NT * TB
    x = x_nchw.astype(jnp.bfloat16)
    if Bp != B:
        x = jnp.pad(x, ((0, Bp - B), (0, 0), (0, 0), (0, 0)))
    S = TB * H * W

    # TODO(synk): the shifted-slab layout prep below (and the phase interleave
    # after the kernel) stays in XLA — pure layout plumbing on KB-scale
    # tensors; doing it in-kernel would need unaligned lane shifts.
    xp = jnp.pad(x, ((0, 0), (0, 0), (1, 1), (1, 1)))             # (Bp,Cin,H+2,W+2)
    slabs = jnp.stack(
        [xp[:, :, py + dy:py + dy + H, px + dx:px + dx + W]
         for py in range(2) for px in range(2)
         for dy in range(2) for dx in range(2)], axis=0)          # (16,Bp,Cin,H,W)
    slabs = slabs.reshape(2, 2, 2, 2, NT, TB, Cin, H, W)
    slabs = slabs.transpose(4, 0, 1, 2, 3, 6, 5, 7, 8)            # (NT,2,2,2,2,Cin,TB,H,W)
    xs = slabs.reshape(NT, 2, 2, 4 * Cin, S)                      # bf16

    wp = _pack_convt_weights(weight).astype(jnp.bfloat16)         # (2,2,Cout,4Cin)
    b2 = bias.reshape(Cout, 1).astype(jnp.float32)

    kern = functools.partial(_convt_kernel, act=act)
    out = pl.pallas_call(
        kern,
        out_shape=jax.ShapeDtypeStruct((NT, 2, 2, Cout, S), out_dtype),
        grid=(NT,),
        in_specs=[
            pl.BlockSpec((1, 2, 2, 4 * Cin, S), lambda t: (t, 0, 0, 0, 0)),
            pl.BlockSpec((2, 2, Cout, 4 * Cin), lambda t: (0, 0, 0, 0)),
            pl.BlockSpec((Cout, 1), lambda t: (0, 0)),
        ],
        out_specs=pl.BlockSpec((1, 2, 2, Cout, S), lambda t: (t, 0, 0, 0, 0)),
        compiler_params=pltpu.CompilerParams(dimension_semantics=("parallel",)),
    )(xs, wp, b2)

    # Interleave the 4 phases back into NCHW: out[t, py, px, oc, (tb, qy, qx)]
    o = out.reshape(NT, 2, 2, Cout, TB, H, W)
    o = o.transpose(0, 4, 3, 5, 1, 6, 2).reshape(Bp, Cout, 2 * H, 2 * W)
    return o[:B]


# --------------------------------------------------------------------------
# Parameter init (PyTorch-like fan_in uniform bounds); fc weight pre-transposed.
# --------------------------------------------------------------------------
def init_decoder_params(key, latent_dim=LATENT_DIM):
    ks = jax.random.split(key, 6)

    def u(k, shape, bound):
        return jax.random.uniform(k, shape, jnp.float32, -bound, bound)

    fc_bound = 1.0 / (latent_dim ** 0.5)
    ct1_bound = 1.0 / ((16 * 4 * 4) ** 0.5)   # fan_in = Cout*kH*kW = 256
    ct2_bound = 1.0 / ((1 * 4 * 4) ** 0.5)    # fan_in = 16
    return {
        "fc_w_t": u(ks[0], (latent_dim, 32 * 7 * 7), fc_bound),  # pre-transposed
        "fc_b":   u(ks[1], (32 * 7 * 7,), fc_bound),
        "ct1_w":  u(ks[2], (32, 16, 4, 4), ct1_bound),           # (Cin,Cout,kH,kW)
        "ct1_b":  u(ks[3], (16,), ct1_bound),
        "ct2_w":  u(ks[4], (16, 1, 4, 4), ct2_bound),
        "ct2_b":  u(ks[5], (1,), ct2_bound),
    }


# --------------------------------------------------------------------------
# Decoder forward (matches PyTorch module semantics).
# --------------------------------------------------------------------------
def decoder_forward(params, z):
    x = linear(z, params["fc_w_t"], params["fc_b"], out_dtype=jnp.bfloat16)  # (B,1568)
    x = x.reshape(-1, 32, 7, 7)                                              # NCHW view
    x = conv_transpose_subpixel(x, params["ct1_w"], params["ct1_b"],
                                act="relu", out_dtype=jnp.bfloat16)          # (B,16,14,14)
    x = conv_transpose_subpixel(x, params["ct2_w"], params["ct2_b"],
                                act="sigmoid", out_dtype=jnp.float32)        # (B,1,28,28)
    return x


# --------------------------------------------------------------------------
# Full-precision XLA reference for correctness checking.
# --------------------------------------------------------------------------
def _reference_decoder(params, z):
    x = z @ params["fc_w_t"] + params["fc_b"]
    x = x.reshape(-1, 32, 7, 7)

    def convt(x, w, b):
        wf = jnp.flip(w, (2, 3)).transpose(1, 0, 2, 3)   # (Cout,Cin,4,4)
        y = jax.lax.conv_general_dilated(
            x, wf, window_strides=(1, 1), padding=((2, 2), (2, 2)),
            lhs_dilation=(2, 2), dimension_numbers=("NCHW", "OIHW", "NCHW"))
        return y + b[None, :, None, None]

    x = jax.nn.relu(convt(x, params["ct1_w"], params["ct1_b"]))
    x = jax.nn.sigmoid(convt(x, params["ct2_w"], params["ct2_b"]))
    return x


if __name__ == "__main__":
    key = jax.random.PRNGKey(0)
    pkey, zkey = jax.random.split(key)

    params = init_decoder_params(pkey, LATENT_DIM)
    z = jax.random.normal(zkey, (2, LATENT_DIM), dtype=jnp.float32)

    out = jax.jit(decoder_forward)(params, z)
    out = jax.block_until_ready(out)

    ref = jax.block_until_ready(jax.jit(_reference_decoder)(params, z))

    assert out.shape == (2, 1, 28, 28), out.shape
    assert bool(jnp.all(jnp.isfinite(out)))
    assert bool(jnp.all((out >= 0.0) & (out <= 1.0)))          # sigmoid range
    max_err = float(jnp.max(jnp.abs(out - ref)))
    assert max_err < 2e-2, f"mismatch vs reference: {max_err}"
    print("KERNEL_OK")
</pallas_src>

<mosaic_0001>
module attributes {stable_mosaic.version = 11 : i64} {
  func.func @_fc_kernel(%arg0: i32, %arg1: memref<2x100xbf16, #tpu.memory_space<vmem>>, %arg2: memref<100x1568xbf16, #tpu.memory_space<vmem>>, %arg3: memref<1x1568xf32, #tpu.memory_space<vmem>>, %arg4: memref<2x1568xbf16, #tpu.memory_space<vmem>>) attributes {dimension_semantics = [#tpu.dimension_semantics<parallel>], iteration_bounds = array<i64: 1>, scalar_prefetch = 0 : i64, scratch_operands = 0 : i64, tpu.core_type = #tpu.core_type<tc>, window_params = [{transform_indices = @transform_0, window_bounds = array<i64: 2, 100>}, {pipeline_mode = #tpu.pipeline_mode<synchronous>, transform_indices = @transform_1, window_bounds = array<i64: 100, 1568>}, {pipeline_mode = #tpu.pipeline_mode<synchronous>, transform_indices = @transform_2, window_bounds = array<i64: 1, 1568>}, {transform_indices = @transform_3, window_bounds = array<i64: 2, 1568>}]} {
    %c0 = arith.constant 0 : index
    %c0_0 = arith.constant 0 : index
    %0 = vector.load %arg1[%c0, %c0_0] : memref<2x100xbf16, #tpu.memory_space<vmem>>, vector<2x100xbf16>
    %c0_1 = arith.constant 0 : index
    %c0_2 = arith.constant 0 : index
    %1 = vector.load %arg2[%c0_1, %c0_2] : memref<100x1568xbf16, #tpu.memory_space<vmem>>, vector<100x1568xbf16>
    %cst = arith.constant dense<0.000000e+00> : vector<2x1568xf32>
    %2 = tpu.matmul %0, %1, %cst {dimension_numbers = #tpu.dot_dimension_numbers<[1], [0], [0], [1], [0, 0, 1, 1], [], []>} : vector<2x100xbf16>, vector<100x1568xbf16>, vector<2x1568xf32> -> vector<2x1568xf32>
    %c0_3 = arith.constant 0 : index
    %c0_4 = arith.constant 0 : index
    %3 = vector.load %arg3[%c0_3, %c0_4] : memref<1x1568xf32, #tpu.memory_space<vmem>>, vector<1x1568xf32>
    %4 = vector.broadcast %3 : vector<1x1568xf32> to vector<2x1568xf32>
    %5 = arith.addf %2, %4 : vector<2x1568xf32>
    %6 = arith.truncf %5 : vector<2x1568xf32> to vector<2x1568xbf16>
    %c0_5 = arith.constant 0 : index
    %c0_6 = arith.constant 0 : index
    %7 = vector.load %arg4[%c0_5, %c0_6] : memref<2x1568xbf16, #tpu.memory_space<vmem>>, vector<2x1568xbf16>
    tpu.vector_store %arg4[%c0_5, %c0_6], %6 {strides = array<i32>} : memref<2x1568xbf16, #tpu.memory_space<vmem>>, vector<2x1568xbf16>,
    return
  }
  func.func @transform_0(%arg0: i32) -> (i32, i32) {
    %c0_i32 = arith.constant 0 : i32
    %c0_i32_0 = arith.constant 0 : i32
    return %arg0, %c0_i32 : i32, i32
  }
  func.func @transform_1(%arg0: i32) -> (i32, i32) {
    %c0_i32 = arith.constant 0 : i32
    %c0_i32_0 = arith.constant 0 : i32
    %c0_i32_1 = arith.constant 0 : i32
    return %c0_i32, %c0_i32_0 : i32, i32
  }
  func.func @transform_2(%arg0: i32) -> (i32, i32) {
    %c0_i32 = arith.constant 0 : i32
    %c0_i32_0 = arith.constant 0 : i32
    %c0_i32_1 = arith.constant 0 : i32
    return %c0_i32, %c0_i32_0 : i32, i32
  }
  func.func @transform_3(%arg0: i32) -> (i32, i32) {
    %c0_i32 = arith.constant 0 : i32
    %c0_i32_0 = arith.constant 0 : i32
    return %arg0, %c0_i32 : i32, i32
  }
}

module attributes {stable_mosaic.version = 11 : i64} {
  func.func @_convt_kernel(%arg0: i32, %arg1: memref<1x2x2x128x98xbf16, #tpu.memory_space<vmem>>, %arg2: memref<2x2x16x128xbf16, #tpu.memory_space<vmem>>, %arg3: memref<16x1xf32, #tpu.memory_space<vmem>>, %arg4: memref<1x2x2x16x98xbf16, #tpu.memory_space<vmem>>) attributes {dimension_semantics = [#tpu.dimension_semantics<parallel>], iteration_bounds = array<i64: 1>, scalar_prefetch = 0 : i64, scratch_operands = 0 : i64, tpu.core_type = #tpu.core_type<tc>, window_params = [{transform_indices = @transform_0, window_bounds = array<i64: 1, 2, 2, 128, 98>}, {pipeline_mode = #tpu.pipeline_mode<synchronous>, transform_indices = @transform_1, window_bounds = array<i64: 2, 2, 16, 128>}, {pipeline_mode = #tpu.pipeline_mode<synchronous>, transform_indices = @transform_2, window_bounds = array<i64: 16, 1>}, {transform_indices = @transform_3, window_bounds = array<i64: 1, 2, 2, 16, 98>}]} {
    %c0 = arith.constant 0 : index
    %c0_0 = arith.constant 0 : index
    %0 = vector.load %arg3[%c0, %c0_0] : memref<16x1xf32, #tpu.memory_space<vmem>>, vector<16x1xf32>
    %c0_1 = arith.constant 0 : index
    %c0_2 = arith.constant 0 : index
    %c0_3 = arith.constant 0 : index
    %c0_4 = arith.constant 0 : index
    %1 = vector.load %arg2[%c0_1, %c0_2, %c0_3, %c0_4] : memref<2x2x16x128xbf16, #tpu.memory_space<vmem>>, vector<1x1x16x128xbf16>
    %2 = vector.shape_cast %1 : vector<1x1x16x128xbf16> to vector<16x128xbf16>
    %c0_5 = arith.constant 0 : index
    %c0_6 = arith.constant 0 : index
    %c0_7 = arith.constant 0 : index
    %c0_8 = arith.constant 0 : index
    %c0_9 = arith.constant 0 : index
    %3 = vector.load %arg1[%c0_5, %c0_6, %c0_7, %c0_8, %c0_9] : memref<1x2x2x128x98xbf16, #tpu.memory_space<vmem>>, vector<1x1x1x128x98xbf16>
    %4 = vector.shape_cast %3 : vector<1x1x1x128x98xbf16> to vector<128x98xbf16>
    %cst = arith.constant dense<0.000000e+00> : vector<16x98xf32>
    %5 = tpu.matmul %2, %4, %cst {dimension_numbers = #tpu.dot_dimension_numbers<[1], [0], [0], [1], [0, 0, 1, 1], [], []>} : vector<16x128xbf16>, vector<128x98xbf16>, vector<16x98xf32> -> vector<16x98xf32>
    %6 = vector.broadcast %0 : vector<16x1xf32> to vector<16x98xf32>
    %7 = arith.addf %5, %6 : vector<16x98xf32>
    %cst_10 = arith.constant 0.000000e+00 : f32
    %8 = vector.broadcast %cst_10 : f32 to vector<16x98xf32>
    %9 = arith.maximumf %7, %8 : vector<16x98xf32>
    %10 = arith.truncf %9 : vector<16x98xf32> to vector<16x98xbf16>
    %c0_11 = arith.constant 0 : index
    %c0_12 = arith.constant 0 : index
    %c0_13 = arith.constant 0 : index
    %c0_14 = arith.constant 0 : index
    %c0_15 = arith.constant 0 : index
    %11 = vector.load %arg4[%c0_11, %c0_12, %c0_13, %c0_14, %c0_15] : memref<1x2x2x16x98xbf16, #tpu.memory_space<vmem>>, vector<1x1x1x16x98xbf16>
    %12 = vector.shape_cast %11 : vector<1x1x1x16x98xbf16> to vector<16x98xbf16>
    %13 = vector.shape_cast %10 : vector<16x98xbf16> to vector<1x1x1x16x98xbf16>
    tpu.vector_store %arg4[%c0_11, %c0_12, %c0_13, %c0_14, %c0_15], %13 {strides = array<i32>} : memref<1x2x2x16x98xbf16, #tpu.memory_space<vmem>>, vector<1x1x1x16x98xbf16>,
    %c0_16 = arith.constant 0 : index
    %c1 = arith.constant 1 : index
    %c0_17 = arith.constant 0 : index
    %c0_18 = arith.constant 0 : index
    %14 = vector.load %arg2[%c0_16, %c1, %c0_17, %c0_18] : memref<2x2x16x128xbf16, #tpu.memory_space<vmem>>, vector<1x1x16x128xbf16>
    %15 = vector.shape_cast %14 : vector<1x1x16x128xbf16> to vector<16x128xbf16>
    %c0_19 = arith.constant 0 : index
    %c0_20 = arith.constant 0 : index
    %c1_21 = arith.constant 1 : index
    %c0_22 = arith.constant 0 : index
    %c0_23 = arith.constant 0 : index
    %16 = vector.load %arg1[%c0_19, %c0_20, %c1_21, %c0_22, %c0_23] : memref<1x2x2x128x98xbf16, #tpu.memory_space<vmem>>, vector<1x1x1x128x98xbf16>
    %17 = vector.shape_cast %16 : vector<1x1x1x128x98xbf16> to vector<128x98xbf16>
    %cst_24 = arith.constant dense<0.000000e+00> : vector<16x98xf32>
    %18 = tpu.matmul %15, %17, %cst_24 {dimension_numbers = #tpu.dot_dimension_numbers<[1], [0], [0], [1], [0, 0, 1, 1], [], []>} : vector<16x128xbf16>, vector<128x98xbf16>, vector<16x98xf32> -> vector<16x98xf32>
    %19 = vector.broadcast %0 : vector<16x1xf32> to vector<16x98xf32>
    %20 = arith.addf %18, %19 : vector<16x98xf32>
    %cst_25 = arith.constant 0.000000e+00 : f32
    %21 = vector.broadcast %cst_25 : f32 to vector<16x98xf32>
    %22 = arith.maximumf %20, %21 : vector<16x98xf32>
    %23 = arith.truncf %22 : vector<16x98xf32> to vector<16x98xbf16>
    %c0_26 = arith.constant 0 : index
    %c0_27 = arith.constant 0 : index
    %c1_28 = arith.constant 1 : index
    %c0_29 = arith.constant 0 : index
    %c0_30 = arith.constant 0 : index
    %24 = vector.load %arg4[%c0_26, %c0_27, %c1_28, %c0_29, %c0_30] : memref<1x2x2x16x98xbf16, #tpu.memory_space<vmem>>, vector<1x1x1x16x98xbf16>
    %25 = vector.shape_cast %24 : vector<1x1x1x16x98xbf16> to vector<16x98xbf16>
    %26 = vector.shape_cast %23 : vector<16x98xbf16> to vector<1x1x1x16x98xbf16>
    tpu.vector_store %arg4[%c0_26, %c0_27, %c1_28, %c0_29, %c0_30], %26 {strides = array<i32>} : memref<1x2x2x16x98xbf16, #tpu.memory_space<vmem>>, vector<1x1x1x16x98xbf16>,
    %c1_31 = arith.constant 1 : index
    %c0_32 = arith.constant 0 : index
    %c0_33 = arith.constant 0 : index
    %c0_34 = arith.constant 0 : index
    %27 = vector.load %arg2[%c1_31, %c0_32, %c0_33, %c0_34] : memref<2x2x16x128xbf16, #tpu.memory_space<vmem>>, vector<1x1x16x128xbf16>
    %28 = vector.shape_cast %27 : vector<1x1x16x128xbf16> to vector<16x128xbf16>
    %c0_35 = arith.constant 0 : index
    %c1_36 = arith.constant 1 : index
    %c0_37 = arith.constant 0 : index
    %c0_38 = arith.constant 0 : index
    %c0_39 = arith.constant 0 : index
    %29 = vector.load %arg1[%c0_35, %c1_36, %c0_37, %c0_38, %c0_39] : memref<1x2x2x128x98xbf16, #tpu.memory_space<vmem>>, vector<1x1x1x128x98xbf16>
    %30 = vector.shape_cast %29 : vector<1x1x1x128x98xbf16> to vector<128x98xbf16>
    %cst_40 = arith.constant dense<0.000000e+00> : vector<16x98xf32>
    %31 = tpu.matmul %28, %30, %cst_40 {dimension_numbers = #tpu.dot_dimension_numbers<[1], [0], [0], [1], [0, 0, 1, 1], [], []>} : vector<16x128xbf16>, vector<128x98xbf16>, vector<16x98xf32> -> vector<16x98xf32>
    %32 = vector.broadcast %0 : vector<16x1xf32> to vector<16x98xf32>
    %33 = arith.addf %31, %32 : vector<16x98xf32>
    %cst_41 = arith.constant 0.000000e+00 : f32
    %34 = vector.broadcast %cst_41 : f32 to vector<16x98xf32>
    %35 = arith.maximumf %33, %34 : vector<16x98xf32>
    %36 = arith.truncf %35 : vector<16x98xf32> to vector<16x98xbf16>
    %c0_42 = arith.constant 0 : index
    %c1_43 = arith.constant 1 : index
    %c0_44 = arith.constant 0 : index
    %c0_45 = arith.constant 0 : index
    %c0_46 = arith.constant 0 : index
    %37 = vector.load %arg4[%c0_42, %c1_43, %c0_44, %c0_45, %c0_46] : memref<1x2x2x16x98xbf16, #tpu.memory_space<vmem>>, vector<1x1x1x16x98xbf16>
    %38 = vector.shape_cast %37 : vector<1x1x1x16x98xbf16> to vector<16x98xbf16>
    %39 = vector.shape_cast %36 : vector<16x98xbf16> to vector<1x1x1x16x98xbf16>
    tpu.vector_store %arg4[%c0_42, %c1_43, %c0_44, %c0_45, %c0_46], %39 {strides = array<i32>} : memref<1x2x2x16x98xbf16, #tpu.memory_space<vmem>>, vector<1x1x1x16x98xbf16>,
    %c1_47 = arith.constant 1 : index
    %c1_48 = arith.constant 1 : index
    %c0_49 = arith.constant 0 : index
    %c0_50 = arith.constant 0 : index
    %40 = vector.load %arg2[%c1_47, %c1_48, %c0_49, %c0_50] : memref<2x2x16x128xbf16, #tpu.memory_space<vmem>>, vector<1x1x16x128xbf16>
    %41 = vector.shape_cast %40 : vector<1x1x16x128xbf16> to vector<16x128xbf16>
    %c0_51 = arith.constant 0 : index
    %c1_52 = arith.constant 1 : index
    %c1_53 = arith.constant 1 : index
    %c0_54 = arith.constant 0 : index
    %c0_55 = arith.constant 0 : index
    %42 = vector.load %arg1[%c0_51, %c1_52, %c1_53, %c0_54, %c0_55] : memref<1x2x2x128x98xbf16, #tpu.memory_space<vmem>>, vector<1x1x1x128x98xbf16>
    %43 = vector.shape_cast %42 : vector<1x1x1x128x98xbf16> to vector<128x98xbf16>
    %cst_56 = arith.constant dense<0.000000e+00> : vector<16x98xf32>
    %44 = tpu.matmul %41, %43, %cst_56 {dimension_numbers = #tpu.dot_dimension_numbers<[1], [0], [0], [1], [0, 0, 1, 1], [], []>} : vector<16x128xbf16>, vector<128x98xbf16>, vector<16x98xf32> -> vector<16x98xf32>
    %45 = vector.broadcast %0 : vector<16x1xf32> to vector<16x98xf32>
    %46 = arith.addf %44, %45 : vector<16x98xf32>
    %cst_57 = arith.constant 0.000000e+00 : f32
    %47 = vector.broadcast %cst_57 : f32 to vector<16x98xf32>
    %48 = arith.maximumf %46, %47 : vector<16x98xf32>
    %49 = arith.truncf %48 : vector<16x98xf32> to vector<16x98xbf16>
    %c0_58 = arith.constant 0 : index
    %c1_59 = arith.constant 1 : index
    %c1_60 = arith.constant 1 : index
    %c0_61 = arith.constant 0 : index
    %c0_62 = arith.constant 0 : index
    %50 = vector.load %arg4[%c0_58, %c1_59, %c1_60, %c0_61, %c0_62] : memref<1x2x2x16x98xbf16, #tpu.memory_space<vmem>>, vector<1x1x1x16x98xbf16>
    %51 = vector.shape_cast %50 : vector<1x1x1x16x98xbf16> to vector<16x98xbf16>
    %52 = vector.shape_cast %49 : vector<16x98xbf16> to vector<1x1x1x16x98xbf16>
    tpu.vector_store %arg4[%c0_58, %c1_59, %c1_60, %c0_61, %c0_62], %52 {strides = array<i32>} : memref<1x2x2x16x98xbf16, #tpu.memory_space<vmem>>, vector<1x1x1x16x98xbf16>,
    return
  }
  func.func @transform_0(%arg0: i32) -> (i32, i32, i32, i32, i32) {
    %c0_i32 = arith.constant 0 : i32
    %c0_i32_0 = arith.constant 0 : i32
    %c0_i32_1 = arith.constant 0 : i32
    %c0_i32_2 = arith.constant 0 : i32
    %c0_i32_3 = arith.constant 0 : i32
    return %arg0, %c0_i32, %c0_i32_0, %c0_i32_1, %c0_i32_2 : i32, i32, i32, i32, i32
  }
  func.func @transform_1(%arg0: i32) -> (i32, i32, i32, i32) {
    %c0_i32 = arith.constant 0 : i32
    %c0_i32_0 = arith.constant 0 : i32
    %c0_i32_1 = arith.constant 0 : i32
    %c0_i32_2 = arith.constant 0 : i32
    %c0_i32_3 = arith.constant 0 : i32
    return %c0_i32, %c0_i32_0, %c0_i32_1, %c0_i32_2 : i32, i32, i32, i32
  }
  func.func @transform_2(%arg0: i32) -> (i32, i32) {
    %c0_i32 = arith.constant 0 : i32
    %c0_i32_0 = arith.constant 0 : i32
    %c0_i32_1 = arith.constant 0 : i32
    return %c0_i32, %c0_i32_0 : i32, i32
  }
  func.func @transform_3(%arg0: i32) -> (i32, i32, i32, i32, i32) {
    %c0_i32 = arith.constant 0 : i32
    %c0_i32_0 = arith.constant 0 : i32
    %c0_i32_1 = arith.constant 0 : i32
    %c0_i32_2 = arith.constant 0 : i32
    %c0_i32_3 = arith.constant 0 : i32
    return %arg0, %c0_i32, %c0_i32_0, %c0_i32_1, %c0_i32_2 : i32, i32, i32, i32, i32
  }
}

module attributes {stable_mosaic.version = 11 : i64} {
  func.func @_convt_kernel(%arg0: i32, %arg1: memref<1x2x2x64x392xbf16, #tpu.memory_space<vmem>>, %arg2: memref<2x2x1x64xbf16, #tpu.memory_space<vmem>>, %arg3: memref<1x1xf32, #tpu.memory_space<vmem>>, %arg4: memref<1x2x2x1x392xf32, #tpu.memory_space<vmem>>) attributes {dimension_semantics = [#tpu.dimension_semantics<parallel>], iteration_bounds = array<i64: 1>, scalar_prefetch = 0 : i64, scratch_operands = 0 : i64, tpu.core_type = #tpu.core_type<tc>, window_params = [{transform_indices = @transform_0, window_bounds = array<i64: 1, 2, 2, 64, 392>}, {pipeline_mode = #tpu.pipeline_mode<synchronous>, transform_indices = @transform_1, window_bounds = array<i64: 2, 2, 1, 64>}, {pipeline_mode = #tpu.pipeline_mode<synchronous>, transform_indices = @transform_2, window_bounds = array<i64: 1, 1>}, {transform_indices = @transform_3, window_bounds = array<i64: 1, 2, 2, 1, 392>}]} {
    %c0 = arith.constant 0 : index
    %c0_0 = arith.constant 0 : index
    %0 = vector.load %arg3[%c0, %c0_0] : memref<1x1xf32, #tpu.memory_space<vmem>>, vector<1x1xf32>
    %c0_1 = arith.constant 0 : index
    %c0_2 = arith.constant 0 : index
    %c0_3 = arith.constant 0 : index
    %c0_4 = arith.constant 0 : index
    %1 = vector.load %arg2[%c0_1, %c0_2, %c0_3, %c0_4] : memref<2x2x1x64xbf16, #tpu.memory_space<vmem>>, vector<1x1x1x64xbf16>
    %2 = vector.shape_cast %1 : vector<1x1x1x64xbf16> to vector<1x64xbf16>
    %c0_5 = arith.constant 0 : index
    %c0_6 = arith.constant 0 : index
    %c0_7 = arith.constant 0 : index
    %c0_8 = arith.constant 0 : index
    %c0_9 = arith.constant 0 : index
    %3 = vector.load %arg1[%c0_5, %c0_6, %c0_7, %c0_8, %c0_9] : memref<1x2x2x64x392xbf16, #tpu.memory_space<vmem>>, vector<1x1x1x64x392xbf16>
    %4 = vector.shape_cast %3 : vector<1x1x1x64x392xbf16> to vector<64x392xbf16>
    %cst = arith.constant dense<0.000000e+00> : vector<1x392xf32>
    %5 = tpu.matmul %2, %4, %cst {dimension_numbers = #tpu.dot_dimension_numbers<[1], [0], [0], [1], [0, 0, 1, 1], [], []>} : vector<1x64xbf16>, vector<64x392xbf16>, vector<1x392xf32> -> vector<1x392xf32>
    %6 = vector.broadcast %0 : vector<1x1xf32> to vector<1x392xf32>
    %7 = arith.addf %5, %6 : vector<1x392xf32>
    %cst_10 = arith.constant 0.000000e+00 : f32
    %8 = vector.broadcast %cst_10 : f32 to vector<1x392xf32>
    %9 = arith.subf %8, %7 : vector<1x392xf32>
    %10 = math.exp %9 : vector<1x392xf32>
    %cst_11 = arith.constant 1.000000e+00 : f32
    %11 = vector.broadcast %cst_11 : f32 to vector<1x392xf32>
    %12 = arith.addf %11, %10 : vector<1x392xf32>
    %cst_12 = arith.constant 1.000000e+00 : f32
    %13 = vector.broadcast %cst_12 : f32 to vector<1x392xf32>
    %14 = arith.divf %13, %12 : vector<1x392xf32>
    %c0_13 = arith.constant 0 : index
    %c0_14 = arith.constant 0 : index
    %c0_15 = arith.constant 0 : index
    %c0_16 = arith.constant 0 : index
    %c0_17 = arith.constant 0 : index
    %15 = vector.load %arg4[%c0_13, %c0_14, %c0_15, %c0_16, %c0_17] : memref<1x2x2x1x392xf32, #tpu.memory_space<vmem>>, vector<1x1x1x1x392xf32>
    %16 = vector.shape_cast %15 : vector<1x1x1x1x392xf32> to vector<1x392xf32>
    %17 = vector.shape_cast %14 : vector<1x392xf32> to vector<1x1x1x1x392xf32>
    tpu.vector_store %arg4[%c0_13, %c0_14, %c0_15, %c0_16, %c0_17], %17 {strides = array<i32>} : memref<1x2x2x1x392xf32, #tpu.memory_space<vmem>>, vector<1x1x1x1x392xf32>,
    %c0_18 = arith.constant 0 : index
    %c1 = arith.constant 1 : index
    %c0_19 = arith.constant 0 : index
    %c0_20 = arith.constant 0 : index
    %18 = vector.load %arg2[%c0_18, %c1, %c0_19, %c0_20] : memref<2x2x1x64xbf16, #tpu.memory_space<vmem>>, vector<1x1x1x64xbf16>
    %19 = vector.shape_cast %18 : vector<1x1x1x64xbf16> to vector<1x64xbf16>
    %c0_21 = arith.constant 0 : index
    %c0_22 = arith.constant 0 : index
    %c1_23 = arith.constant 1 : index
    %c0_24 = arith.constant 0 : index
    %c0_25 = arith.constant 0 : index
    %20 = vector.load %arg1[%c0_21, %c0_22, %c1_23, %c0_24, %c0_25] : memref<1x2x2x64x392xbf16, #tpu.memory_space<vmem>>, vector<1x1x1x64x392xbf16>
    %21 = vector.shape_cast %20 : vector<1x1x1x64x392xbf16> to vector<64x392xbf16>
    %cst_26 = arith.constant dense<0.000000e+00> : vector<1x392xf32>
    %22 = tpu.matmul %19, %21, %cst_26 {dimension_numbers = #tpu.dot_dimension_numbers<[1], [0], [0], [1], [0, 0, 1, 1], [], []>} : vector<1x64xbf16>, vector<64x392xbf16>, vector<1x392xf32> -> vector<1x392xf32>
    %23 = vector.broadcast %0 : vector<1x1xf32> to vector<1x392xf32>
    %24 = arith.addf %22, %23 : vector<1x392xf32>
    %cst_27 = arith.constant 0.000000e+00 : f32
    %25 = vector.broadcast %cst_27 : f32 to vector<1x392xf32>
    %26 = arith.subf %25, %24 : vector<1x392xf32>
    %27 = math.exp %26 : vector<1x392xf32>
    %cst_28 = arith.constant 1.000000e+00 : f32
    %28 = vector.broadcast %cst_28 : f32 to vector<1x392xf32>
    %29 = arith.addf %28, %27 : vector<1x392xf32>
    %cst_29 = arith.constant 1.000000e+00 : f32
    %30 = vector.broadcast %cst_29 : f32 to vector<1x392xf32>
    %31 = arith.divf %30, %29 : vector<1x392xf32>
    %c0_30 = arith.constant 0 : index
    %c0_31 = arith.constant 0 : index
    %c1_32 = arith.constant 1 : index
    %c0_33 = arith.constant 0 : index
    %c0_34 = arith.constant 0 : index
    %32 = vector.load %arg4[%c0_30, %c0_31, %c1_32, %c0_33, %c0_34] : memref<1x2x2x1x392xf32, #tpu.memory_space<vmem>>, vector<1x1x1x1x392xf32>
    %33 = vector.shape_cast %32 : vector<1x1x1x1x392xf32> to vector<1x392xf32>
    %34 = vector.shape_cast %31 : vector<1x392xf32> to vector<1x1x1x1x392xf32>
    tpu.vector_store %arg4[%c0_30, %c0_31, %c1_32, %c0_33, %c0_34], %34 {strides = array<i32>} : memref<1x2x2x1x392xf32, #tpu.memory_space<vmem>>, vector<1x1x1x1x392xf32>,
    %c1_35 = arith.constant 1 : index
    %c0_36 = arith.constant 0 : index
    %c0_37 = arith.constant 0 : index
    %c0_38 = arith.constant 0 : index
    %35 = vector.load %arg2[%c1_35, %c0_36, %c0_37, %c0_38] : memref<2x2x1x64xbf16, #tpu.memory_space<vmem>>, vector<1x1x1x64xbf16>
    %36 = vector.shape_cast %35 : vector<1x1x1x64xbf16> to vector<1x64xbf16>
    %c0_39 = arith.constant 0 : index
    %c1_40 = arith.constant 1 : index
    %c0_41 = arith.constant 0 : index
    %c0_42 = arith.constant 0 : index
    %c0_43 = arith.constant 0 : index
    %37 = vector.load %arg1[%c0_39, %c1_40, %c0_41, %c0_42, %c0_43] : memref<1x2x2x64x392xbf16, #tpu.memory_space<vmem>>, vector<1x1x1x64x392xbf16>
    %38 = vector.shape_cast %37 : vector<1x1x1x64x392xbf16> to vector<64x392xbf16>
    %cst_44 = arith.constant dense<0.000000e+00> : vector<1x392xf32>
    %39 = tpu.matmul %36, %38, %cst_44 {dimension_numbers = #tpu.dot_dimension_numbers<[1], [0], [0], [1], [0, 0, 1, 1], [], []>} : vector<1x64xbf16>, vector<64x392xbf16>, vector<1x392xf32> -> vector<1x392xf32>
    %40 = vector.broadcast %0 : vector<1x1xf32> to vector<1x392xf32>
    %41 = arith.addf %39, %40 : vector<1x392xf32>
    %cst_45 = arith.constant 0.000000e+00 : f32
    %42 = vector.broadcast %cst_45 : f32 to vector<1x392xf32>
    %43 = arith.subf %42, %41 : vector<1x392xf32>
    %44 = math.exp %43 : vector<1x392xf32>
    %cst_46 = arith.constant 1.000000e+00 : f32
    %45 = vector.broadcast %cst_46 : f32 to vector<1x392xf32>
    %46 = arith.addf %45, %44 : vector<1x392xf32>
    %cst_47 = arith.constant 1.000000e+00 : f32
    %47 = vector.broadcast %cst_47 : f32 to vector<1x392xf32>
    %48 = arith.divf %47, %46 : vector<1x392xf32>
    %c0_48 = arith.constant 0 : index
    %c1_49 = arith.constant 1 : index
    %c0_50 = arith.constant 0 : index
    %c0_51 = arith.constant 0 : index
    %c0_52 = arith.constant 0 : index
    %49 = vector.load %arg4[%c0_48, %c1_49, %c0_50, %c0_51, %c0_52] : memref<1x2x2x1x392xf32, #tpu.memory_space<vmem>>, vector<1x1x1x1x392xf32>
    %50 = vector.shape_cast %49 : vector<1x1x1x1x392xf32> to vector<1x392xf32>
    %51 = vector.shape_cast %48 : vector<1x392xf32> to vector<1x1x1x1x392xf32>
    tpu.vector_store %arg4[%c0_48, %c1_49, %c0_50, %c0_51, %c0_52], %51 {strides = array<i32>} : memref<1x2x2x1x392xf32, #tpu.memory_space<vmem>>, vector<1x1x1x1x392xf32>,
    %c1_53 = arith.constant 1 : index
    %c1_54 = arith.constant 1 : index
    %c0_55 = arith.constant 0 : index
    %c0_56 = arith.constant 0 : index
    %52 = vector.load %arg2[%c1_53, %c1_54, %c0_55, %c0_56] : memref<2x2x1x64xbf16, #tpu.memory_space<vmem>>, vector<1x1x1x64xbf16>
    %53 = vector.shape_cast %52 : vector<1x1x1x64xbf16> to vector<1x64xbf16>
    %c0_57 = arith.constant 0 : index
    %c1_58 = arith.constant 1 : index
    %c1_59 = arith.constant 1 : index
    %c0_60 = arith.constant 0 : index
    %c0_61 = arith.constant 0 : index
    %54 = vector.load %arg1[%c0_57, %c1_58, %c1_59, %c0_60, %c0_61] : memref<1x2x2x64x392xbf16, #tpu.memory_space<vmem>>, vector<1x1x1x64x392xbf16>
    %55 = vector.shape_cast %54 : vector<1x1x1x64x392xbf16> to vector<64x392xbf16>
    %cst_62 = arith.constant dense<0.000000e+00> : vector<1x392xf32>
    %56 = tpu.matmul %53, %55, %cst_62 {dimension_numbers = #tpu.dot_dimension_numbers<[1], [0], [0], [1], [0, 0, 1, 1], [], []>} : vector<1x64xbf16>, vector<64x392xbf16>, vector<1x392xf32> -> vector<1x392xf32>
    %57 = vector.broadcast %0 : vector<1x1xf32> to vector<1x392xf32>
    %58 = arith.addf %56, %57 : vector<1x392xf32>
    %cst_63 = arith.constant 0.000000e+00 : f32
    %59 = vector.broadcast %cst_63 : f32 to vector<1x392xf32>
    %60 = arith.subf %59, %58 : vector<1x392xf32>
    %61 = math.exp %60 : vector<1x392xf32>
    %cst_64 = arith.constant 1.000000e+00 : f32
    %62 = vector.broadcast %cst_64 : f32 to vector<1x392xf32>
    %63 = arith.addf %62, %61 : vector<1x392xf32>
    %cst_65 = arith.constant 1.000000e+00 : f32
    %64 = vector.broadcast %cst_65 : f32 to vector<1x392xf32>
    %65 = arith.divf %64, %63 : vector<1x392xf32>
    %c0_66 = arith.constant 0 : index
    %c1_67 = arith.constant 1 : index
    %c1_68 = arith.constant 1 : index
    %c0_69 = arith.constant 0 : index
    %c0_70 = arith.constant 0 : index
    %66 = vector.load %arg4[%c0_66, %c1_67, %c1_68, %c0_69, %c0_70] : memref<1x2x2x1x392xf32, #tpu.memory_space<vmem>>, vector<1x1x1x1x392xf32>
    %67 = vector.shape_cast %66 : vector<1x1x1x1x392xf32> to vector<1x392xf32>
    %68 = vector.shape_cast %65 : vector<1x392xf32> to vector<1x1x1x1x392xf32>
    tpu.vector_store %arg4[%c0_66, %c1_67, %c1_68, %c0_69, %c0_70], %68 {strides = array<i32>} : memref<1x2x2x1x392xf32, #tpu.memory_space<vmem>>, vector<1x1x1x1x392xf32>,
    return
  }
  func.func @transform_0(%arg0: i32) -> (i32, i32, i32, i32, i32) {
    %c0_i32 = arith.constant 0 : i32
    %c0_i32_0 = arith.constant 0 : i32
    %c0_i32_1 = arith.constant 0 : i32
    %c0_i32_2 = arith.constant 0 : i32
    %c0_i32_3 = arith.constant 0 : i32
    return %arg0, %c0_i32, %c0_i32_0, %c0_i32_1, %c0_i32_2 : i32, i32, i32, i32, i32
  }
  func.func @transform_1(%arg0: i32) -> (i32, i32, i32, i32) {
    %c0_i32 = arith.constant 0 : i32
    %c0_i32_0 = arith.constant 0 : i32
    %c0_i32_1 = arith.constant 0 : i32
    %c0_i32_2 = arith.constant 0 : i32
    %c0_i32_3 = arith.constant 0 : i32
    return %c0_i32, %c0_i32_0, %c0_i32_1, %c0_i32_2 : i32, i32, i32, i32
  }
  func.func @transform_2(%arg0: i32) -> (i32, i32) {
    %c0_i32 = arith.constant 0 : i32
    %c0_i32_0 = arith.constant 0 : i32
    %c0_i32_1 = arith.constant 0 : i32
    return %c0_i32, %c0_i32_0 : i32, i32
  }
  func.func @transform_3(%arg0: i32) -> (i32, i32, i32, i32, i32) {
    %c0_i32 = arith.constant 0 : i32
    %c0_i32_0 = arith.constant 0 : i32
    %c0_i32_1 = arith.constant 0 : i32
    %c0_i32_2 = arith.constant 0 : i32
    %c0_i32_3 = arith.constant 0 : i32
    return %arg0, %c0_i32, %c0_i32_0, %c0_i32_1, %c0_i32_2 : i32, i32, i32, i32, i32
  }
}

</mosaic_0001>

<llo_original>
// kernel: decoder_forward.3
$region0: #{decoder_forward.3}
  #allocation0 [shape = 'u32[]', space=smem, size = 0x4, offset = 0x4, fixed_abs, tag = 'smem constant byte address 0x4 - core index']
  #allocation1 [shape = 'u32[72,128]{1,0:T(1,128)}', space=vmem, size = 0x9000, scoped, tag = 'internal scratch']
  %s0 = inlined_call_operand.vmem [shape: bf16[2,100], index: 0, kind: input, shape index: {}]
  %s1 = inlined_call_operand.vmem [shape: bf16[100,1568], index: 1, kind: input, shape index: {}]
  %s2 = inlined_call_operand.vmem [shape: f32[1,1568], index: 2, kind: input, shape index: {}]
  %s3 = inlined_call_operand.vmem [shape: bf16[2,1568], index: 3, kind: output, shape index: {}]
  %s4 = sld [smem:[#allocation0]]
  $region22: #{decoder_forward.3} parent=0
    _
  %s6 = ssub.s32 1, %s4
  %s7 = scalar_select 0, %s6, %s4
  // Predicated region
  $region2: #{decoder_forward.3} parent=0 // pred_check
    _
  $region3: #{decoder_forward.3} parent=0 // pred_check_branch
    %9 = sbr.rel (0) target = $region5
  $region4: #{decoder_forward.3} parent=0 // pred_region
    _
  $region5: #{decoder_forward.3} parent=0 // pred_fallthru
    _
  // Predicated region
  $region6: #{decoder_forward.3} parent=0 // pred_check
    _
  $region7: #{decoder_forward.3} parent=0 // pred_check_branch
    %11 = sbr.rel (0) target = $region9
  $region8: #{decoder_forward.3} parent=0 // pred_region
    _
  $region9: #{decoder_forward.3} parent=0 // pred_fallthru
    _
  // Predicated region
  $region10: #{decoder_forward.3} parent=0 // pred_check
    _
  $region11: #{decoder_forward.3} parent=0 // pred_check_branch
    %13 = sbr.rel (0) target = $region13
  $region12: #{decoder_forward.3} parent=0 // pred_region
    _
  $region13: #{decoder_forward.3} parent=0 // pred_fallthru
    _
  %v15 = vld [vmem:[%s0] sm:$0x1]
  %v16 = vld [vmem:[%s1] sm:$0xff]
  %v17 = vld [vmem:[%s1 + $0x8] sm:$0xff]
  %v18 = vld [vmem:[%s1 + $0x10] sm:$0xff]
  %v19 = vld [vmem:[%s1 + $0x18] sm:$0xff]
  %v20 = vld [vmem:[%s1 + $0x20] sm:$0xff]
  %v21 = vld [vmem:[%s1 + $0x28] sm:$0xff]
  %v22 = vld [vmem:[%s1 + $0x30] sm:$0xf]
  %v23 = vld [vmem:[%s1 + $0x34] sm:$0xff]
  %v24 = vld [vmem:[%s1 + $0x3c] sm:$0xff]
  %v25 = vld [vmem:[%s1 + $0x44] sm:$0xff]
  %v26 = vld [vmem:[%s1 + $0x4c] sm:$0xff]
  %v27 = vld [vmem:[%s1 + $0x54] sm:$0xff]
  %v28 = vld [vmem:[%s1 + $0x5c] sm:$0xff]
  %v29 = vld [vmem:[%s1 + $0x64] sm:$0xf]
  %v30 = vld [vmem:[%s1 + $0x68] sm:$0xff]
  %v31 = vld [vmem:[%s1 + $0x70] sm:$0xff]
  %v32 = vld [vmem:[%s1 + $0x78] sm:$0xff]
  %v33 = vld [vmem:[%s1 + $0x80] sm:$0xff]
  %v34 = vld [vmem:[%s1 + $0x88] sm:$0xff]
  %v35 = vld [vmem:[%s1 + $0x90] sm:$0xff]
  %v36 = vld [vmem:[%s1 + $0x98] sm:$0xf]
  %v37 = vld [vmem:[%s1 + $0x9c] sm:$0xff]
  %v38 = vld [vmem:[%s1 + $0xa4] sm:$0xff]
  %v39 = vld [vmem:[%s1 + $0xac] sm:$0xff]
  %v40 = vld [vmem:[%s1 + $0xb4] sm:$0xff]
  %v41 = vld [vmem:[%s1 + $0xbc] sm:$0xff]
  %v42 = vld [vmem:[%s1 + $0xc4] sm:$0xff]
  %v43 = vld [vmem:[%s1 + $0xcc] sm:$0xf]
  %v44 = vld [vmem:[%s1 + $0xd0] sm:$0xff]
  %v45 = vld [vmem:[%s1 + $0xd8] sm:$0xff]
  %v46 = vld [vmem:[%s1 + $0xe0] sm:$0xff]
  %v47 = vld [vmem:[%s1 + $0xe8] sm:$0xff]
  %v48 = vld [vmem:[%s1 + $0xf0] sm:$0xff]
  %v49 = vld [vmem:[%s1 + $0xf8] sm:$0xff]
  %v50 = vld [vmem:[%s1 + $0x100] sm:$0xf]
  %v51 = vld [vmem:[%s1 + $0x104] sm:$0xff]
  %v52 = vld [vmem:[%s1 + $0x10c] sm:$0xff]
  %v53 = vld [vmem:[%s1 + $0x114] sm:$0xff]
  %v54 = vld [vmem:[%s1 + $0x11c] sm:$0xff]
  %v55 = vld [vmem:[%s1 + $0x124] sm:$0xff]
  %v56 = vld [vmem:[%s1 + $0x12c] sm:$0xff]
  %v57 = vld [vmem:[%s1 + $0x134] sm:$0xf]
  %v58 = vld [vmem:[%s1 + $0x138] sm:$0xff]
  %v59 = vld [vmem:[%s1 + $0x140] sm:$0xff]
  %v60 = vld [vmem:[%s1 + $0x148] sm:$0xff]
  %v61 = vld [vmem:[%s1 + $0x150] sm:$0xff]
  %v62 = vld [vmem:[%s1 + $0x158] sm:$0xff]
  %v63 = vld [vmem:[%s1 + $0x160] sm:$0xff]
  %v64 = vld [vmem:[%s1 + $0x168] sm:$0xf]
  %v65 = vld [vmem:[%s1 + $0x16c] sm:$0xff]
  %v66 = vld [vmem:[%s1 + $0x174] sm:$0xff]
  %v67 = vld [vmem:[%s1 + $0x17c] sm:$0xff]
  %v68 = vld [vmem:[%s1 + $0x184] sm:$0xff]
  %v69 = vld [vmem:[%s1 + $0x18c] sm:$0xff]
  %v70 = vld [vmem:[%s1 + $0x194] sm:$0xff]
  %v71 = vld [vmem:[%s1 + $0x19c] sm:$0xf]
  %v72 = vld [vmem:[%s1 + $0x1a0] sm:$0xff]
  %v73 = vld [vmem:[%s1 + $0x1a8] sm:$0xff]
  %v74 = vld [vmem:[%s1 + $0x1b0] sm:$0xff]
  %v75 = vld [vmem:[%s1 + $0x1b8] sm:$0xff]
  %v76 = vld [vmem:[%s1 + $0x1c0] sm:$0xff]
  %v77 = vld [vmem:[%s1 + $0x1c8] sm:$0xff]
  %v78 = vld [vmem:[%s1 + $0x1d0] sm:$0xf]
  %v79 = vld [vmem:[%s1 + $0x1d4] sm:$0xff]
  %v80 = vld [vmem:[%s1 + $0x1dc] sm:$0xff]
  %v81 = vld [vmem:[%s1 + $0x1e4] sm:$0xff]
  %v82 = vld [vmem:[%s1 + $0x1ec] sm:$0xff]
  %v83 = vld [vmem:[%s1 + $0x1f4] sm:$0xff]
  %v84 = vld [vmem:[%s1 + $0x1fc] sm:$0xff]
  %v85 = vld [vmem:[%s1 + $0x204] sm:$0xf]
  %v86 = vld [vmem:[%s1 + $0x208] sm:$0xff]
  %v87 = vld [vmem:[%s1 + $0x210] sm:$0xff]
  %v88 = vld [vmem:[%s1 + $0x218] sm:$0xff]
  %v89 = vld [vmem:[%s1 + $0x220] sm:$0xff]
  %v90 = vld [vmem:[%s1 + $0x228] sm:$0xff]
  %v91 = vld [vmem:[%s1 + $0x230] sm:$0xff]
  %v92 = vld [vmem:[%s1 + $0x238] sm:$0xf]
  %v93 = vld [vmem:[%s1 + $0x23c] sm:$0xff]
  %v94 = vld [vmem:[%s1 + $0x244] sm:$0xff]
  %v95 = vld [vmem:[%s1 + $0x24c] sm:$0xff]
  %v96 = vld [vmem:[%s1 + $0x254] sm:$0xff]
  %v97 = vld [vmem:[%s1 + $0x25c] sm:$0xff]
  %v98 = vld [vmem:[%s1 + $0x264] sm:$0xff]
  %v99 = vld [vmem:[%s1 + $0x26c] sm:$0xf]
  %v100 = vld [vmem:[%s1 + $0x270] sm:$0x33]
  %v101 = vld [vmem:[%s1 + $0x278] sm:$0x33]
  %v102 = vld [vmem:[%s1 + $0x280] sm:$0x33]
  %v103 = vld [vmem:[%s1 + $0x288] sm:$0x33]
  %v104 = vld [vmem:[%s1 + $0x290] sm:$0x33]
  %v105 = vld [vmem:[%s1 + $0x298] sm:$0x33]
  %v106 = vld [vmem:[%s1 + $0x2a0] sm:$0x3]
  %v107 = vld [vmem:[%s2] sm:$0xff]
  %v108 = vld [vmem:[%s2 + $0x8] sm:$0x1f]
  %v111 = vperm.slane %v107, 0
  %v112 = vperm.slane %v107, 1
  %v113 = vperm.slane %v107, 2
  %v114 = vperm.slane %v107, 3
  %v115 = vperm.slane %v107, 4
  %v116 = vperm.slane %v107, 5
  %v117 = vperm.slane %v107, 6
  %v118 = vperm.slane %v107, 7
  %v119 = vperm.slane %v108, 0
  %v120 = vperm.slane %v108, 1
  %v121 = vperm.slane %v108, 2
  %v122 = vperm.slane %v108, 3
  %v123 = vperm.slane %v108, 4
  %v228 = vunpack.c.l.b16 %v16
  %v229 = vunpack.c.h.b16 %v16
  %v230 = vunpack.c.l.b16 %v17
  %v231 = vunpack.c.h.b16 %v17
  %v232 = vunpack.c.l.b16 %v18
  %v233 = vunpack.c.h.b16 %v18
  %v234 = vunpack.c.l.b16 %v19
  %v235 = vunpack.c.h.b16 %v19
  %v236 = vunpack.c.l.b16 %v20
  %v237 = vunpack.c.h.b16 %v20
  %v238 = vunpack.c.l.b16 %v21
  %v239 = vunpack.c.h.b16 %v21
  %v240 = vunpack.c.l.b16 %v22
  %v241 = vunpack.c.l.b16 %v23
  %v242 = vunpack.c.h.b16 %v23
  %v243 = vunpack.c.l.b16 %v24
  %v244 = vunpack.c.h.b16 %v24
  %v245 = vunpack.c.l.b16 %v25
  %v246 = vunpack.c.h.b16 %v25
  %v247 = vunpack.c.l.b16 %v26
  %v248 = vunpack.c.h.b16 %v26
  %v249 = vunpack.c.l.b16 %v27
  %v250 = vunpack.c.h.b16 %v27
  %v251 = vunpack.c.l.b16 %v28
  %v252 = vunpack.c.h.b16 %v28
  %v253 = vunpack.c.l.b16 %v29
  %v254 = vunpack.c.l.b16 %v30
  %v255 = vunpack.c.h.b16 %v30
  %v256 = vunpack.c.l.b16 %v31
  %v257 = vunpack.c.h.b16 %v31
  %v258 = vunpack.c.l.b16 %v32
  %v259 = vunpack.c.h.b16 %v32
  %v260 = vunpack.c.l.b16 %v33
  %v261 = vunpack.c.h.b16 %v33
  %v262 = vunpack.c.l.b16 %v34
  %v263 = vunpack.c.h.b16 %v34
  %v264 = vunpack.c.l.b16 %v35
  %v265 = vunpack.c.h.b16 %v35
  %v266 = vunpack.c.l.b16 %v36
  %v267 = vunpack.c.l.b16 %v37
  %v268 = vunpack.c.h.b16 %v37
  %v269 = vunpack.c.l.b16 %v38
  %v270 = vunpack.c.h.b16 %v38
  %v271 = vunpack.c.l.b16 %v39
  %v272 = vunpack.c.h.b16 %v39
  %v273 = vunpack.c.l.b16 %v40
  %v274 = vunpack.c.h.b16 %v40
  %v275 = vunpack.c.l.b16 %v41
  %v276 = vunpack.c.h.b16 %v41
  %v277 = vunpack.c.l.b16 %v42
  %v278 = vunpack.c.h.b16 %v42
  %v279 = vunpack.c.l.b16 %v43
  %v280 = vunpack.c.l.b16 %v44
  %v281 = vunpack.c.h.b16 %v44
  %v282 = vunpack.c.l.b16 %v45
  %v283 = vunpack.c.h.b16 %v45
  %v284 = vunpack.c.l.b16 %v46
  %v285 = vunpack.c.h.b16 %v46
  %v286 = vunpack.c.l.b16 %v47
  %v287 = vunpack.c.h.b16 %v47
  %v288 = vunpack.c.l.b16 %v48
  %v289 = vunpack.c.h.b16 %v48
  %v290 = vunpack.c.l.b16 %v49
  %v291 = vunpack.c.h.b16 %v49
  %v292 = vunpack.c.l.b16 %v50
  %v293 = vunpack.c.l.b16 %v51
  %v294 = vunpack.c.h.b16 %v51
  %v295 = vunpack.c.l.b16 %v52
  %v296 = vunpack.c.h.b16 %v52
  %v297 = vunpack.c.l.b16 %v53
  %v298 = vunpack.c.h.b16 %v53
  %v299 = vunpack.c.l.b16 %v54
  %v300 = vunpack.c.h.b16 %v54
  %v301 = vunpack.c.l.b16 %v55
  %v302 = vunpack.c.h.b16 %v55
  %v303 = vunpack.c.l.b16 %v56
  %v304 = vunpack.c.h.b16 %v56
  %v305 = vunpack.c.l.b16 %v57
  %v306 = vunpack.c.l.b16 %v58
  %v307 = vunpack.c.h.b16 %v58
  %v308 = vunpack.c.l.b16 %v59
  %v309 = vunpack.c.h.b16 %v59
  %v310 = vunpack.c.l.b16 %v60
  %v311 = vunpack.c.h.b16 %v60
  %v312 = vunpack.c.l.b16 %v61
  %v313 = vunpack.c.h.b16 %v61
  %v314 = vunpack.c.l.b16 %v62
  %v315 = vunpack.c.h.b16 %v62
  %v316 = vunpack.c.l.b16 %v63
  %v317 = vunpack.c.h.b16 %v63
  %v318 = vunpack.c.l.b16 %v64
  %v319 = vunpack.c.l.b16 %v65
  %v320 = vunpack.c.h.b16 %v65
  %v321 = vunpack.c.l.b16 %v66
  %v322 = vunpack.c.h.b16 %v66
  %v323 = vunpack.c.l.b16 %v67
  %v324 = vunpack.c.h.b16 %v67
  %v325 = vunpack.c.l.b16 %v68
  %v326 = vunpack.c.h.b16 %v68
  %v327 = vunpack.c.l.b16 %v69
  %v328 = vunpack.c.h.b16 %v69
  %v329 = vunpack.c.l.b16 %v70
  %v330 = vunpack.c.h.b16 %v70
  %v331 = vunpack.c.l.b16 %v71
  %v332 = vunpack.c.l.b16 %v72
  %v333 = vunpack.c.h.b16 %v72
  %v334 = vunpack.c.l.b16 %v73
  %v335 = vunpack.c.h.b16 %v73
  %v336 = vunpack.c.l.b16 %v74
  %v337 = vunpack.c.h.b16 %v74
  %v338 = vunpack.c.l.b16 %v75
  %v339 = vunpack.c.h.b16 %v75
  %v340 = vunpack.c.l.b16 %v76
  %v341 = vunpack.c.h.b16 %v76
  %v342 = vunpack.c.l.b16 %v77
  %v343 = vunpack.c.h.b16 %v77
  %v344 = vunpack.c.l.b16 %v78
  %v345 = vunpack.c.l.b16 %v79
  %v346 = vunpack.c.h.b16 %v79
  %v347 = vunpack.c.l.b16 %v80
  %v348 = vunpack.c.h.b16 %v80
  %v349 = vunpack.c.l.b16 %v81
  %v350 = vunpack.c.h.b16 %v81
  %v351 = vunpack.c.l.b16 %v82
  %v352 = vunpack.c.h.b16 %v82
  %v353 = vunpack.c.l.b16 %v83
  %v354 = vunpack.c.h.b16 %v83
  %v355 = vunpack.c.l.b16 %v84
  %v356 = vunpack.c.h.b16 %v84
  %v357 = vunpack.c.l.b16 %v85
  %v358 = vunpack.c.l.b16 %v86
  %v359 = vunpack.c.h.b16 %v86
  %v360 = vunpack.c.l.b16 %v87
  %v361 = vunpack.c.h.b16 %v87
  %v362 = vunpack.c.l.b16 %v88
  %v363 = vunpack.c.h.b16 %v88
  %v364 = vunpack.c.l.b16 %v89
  %v365 = vunpack.c.h.b16 %v89
  %v366 = vunpack.c.l.b16 %v90
  %v367 = vunpack.c.h.b16 %v90
  %v368 = vunpack.c.l.b16 %v91
  %v369 = vunpack.c.h.b16 %v91
  %v370 = vunpack.c.l.b16 %v92
  %v371 = vunpack.c.l.b16 %v93
  %v372 = vunpack.c.h.b16 %v93
  %v373 = vunpack.c.l.b16 %v94
  %v374 = vunpack.c.h.b16 %v94
  %v375 = vunpack.c.l.b16 %v95
  %v376 = vunpack.c.h.b16 %v95
  %v377 = vunpack.c.l.b16 %v96
  %v378 = vunpack.c.h.b16 %v96
  %v379 = vunpack.c.l.b16 %v97
  %v380 = vunpack.c.h.b16 %v97
  %v381 = vunpack.c.l.b16 %v98
  %v382 = vunpack.c.h.b16 %v98
  %v383 = vunpack.c.l.b16 %v99
  %v384 = vunpack.c.l.b16 %v100
  %v385 = vunpack.c.h.b16 %v100
  %v386 = vunpack.c.l.b16 %v101
  %v387 = vunpack.c.h.b16 %v101
  %v388 = vunpack.c.l.b16 %v102
  %v389 = vunpack.c.h.b16 %v102
  %v390 = vunpack.c.l.b16 %v103
  %v391 = vunpack.c.h.b16 %v103
  %v392 = vunpack.c.l.b16 %v104
  %v393 = vunpack.c.h.b16 %v104
  %v394 = vunpack.c.l.b16 %v105
  %v395 = vunpack.c.h.b16 %v105
  %v396 = vunpack.c.l.b16 %v106
  %v397 = vpack.c.b16 %v241, %v228
  %v398 = vpack.c.b16 %v242, %v229
  %v399 = vpack.c.b16 %v243, %v230
  %v400 = vpack.c.b16 %v244, %v231
  %v401 = vpack.c.b16 %v245, %v232
  %v402 = vpack.c.b16 %v246, %v233
  %v403 = vpack.c.b16 %v247, %v234
  %v404 = vpack.c.b16 %v248, %v235
  %v405 = vpack.c.b16 %v249, %v236
  %v406 = vpack.c.b16 %v250, %v237
  %v407 = vpack.c.b16 %v251, %v238
  %v408 = vpack.c.b16 %v252, %v239
  %v409 = vpack.c.b16 %v253, %v240
  %v410 = vpack.c.b16 %v267, %v254
  %v411 = vpack.c.b16 %v268, %v255
  %v412 = vpack.c.b16 %v269, %v256
  %v413 = vpack.c.b16 %v270, %v257
  %v414 = vpack.c.b16 %v271, %v258
  %v415 = vpack.c.b16 %v272, %v259
  %v416 = vpack.c.b16 %v273, %v260
  %v417 = vpack.c.b16 %v274, %v261
  %v418 = vpack.c.b16 %v275, %v262
  %v419 = vpack.c.b16 %v276, %v263
  %v420 = vpack.c.b16 %v277, %v264
  %v421 = vpack.c.b16 %v278, %v265
  %v422 = vpack.c.b16 %v279, %v266
  %v423 = vpack.c.b16 %v293, %v280
  %v424 = vpack.c.b16 %v294, %v281
  %v425 = vpack.c.b16 %v295, %v282
  %v426 = vpack.c.b16 %v296, %v283
  %v427 = vpack.c.b16 %v297, %v284
  %v428 = vpack.c.b16 %v298, %v285
  %v429 = vpack.c.b16 %v299, %v286
  %v430 = vpack.c.b16 %v300, %v287
  %v431 = vpack.c.b16 %v301, %v288
  %v432 = vpack.c.b16 %v302, %v289
  %v433 = vpack.c.b16 %v303, %v290
  %v434 = vpack.c.b16 %v304, %v291
  %v435 = vpack.c.b16 %v305, %v292
  %v436 = vpack.c.b16 %v319, %v306
  %v437 = vpack.c.b16 %v320, %v307
  %v438 = vpack.c.b16 %v321, %v308
  %v439 = vpack.c.b16 %v322, %v309
  %v440 = vpack.c.b16 %v323, %v310
  %v441 = vpack.c.b16 %v324, %v311
  %v442 = vpack.c.b16 %v325, %v312
  %v443 = vpack.c.b16 %v326, %v313
  %v444 = vpack.c.b16 %v327, %v314
  %v445 = vpack.c.b16 %v328, %v315
  %v446 = vpack.c.b16 %v329, %v316
  %v447 = vpack.c.b16 %v330, %v317
  %v448 = vpack.c.b16 %v331, %v318
  %v449 = vpack.c.b16 %v345, %v332
  %v450 = vpack.c.b16 %v346, %v333
  %v451 = vpack.c.b16 %v347, %v334
  %v452 = vpack.c.b16 %v348, %v335
  %v453 = vpack.c.b16 %v349, %v336
  %v454 = vpack.c.b16 %v350, %v337
  %v455 = vpack.c.b16 %v351, %v338
  %v456 = vpack.c.b16 %v352, %v339
  %v457 = vpack.c.b16 %v353, %v340
  %v458 = vpack.c.b16 %v354, %v341
  %v459 = vpack.c.b16 %v355, %v342
  %v460 = vpack.c.b16 %v356, %v343
  %v461 = vpack.c.b16 %v357, %v344
  %v462 = vpack.c.b16 %v371, %v358
  %v463 = vpack.c.b16 %v372, %v359
  %v464 = vpack.c.b16 %v373, %v360
  %v465 = vpack.c.b16 %v374, %v361
  %v466 = vpack.c.b16 %v375, %v362
  %v467 = vpack.c.b16 %v376, %v363
  %v468 = vpack.c.b16 %v377, %v364
  %v469 = vpack.c.b16 %v378, %v365
  %v470 = vpack.c.b16 %v379, %v366
  %v471 = vpack.c.b16 %v380, %v367
  %v472 = vpack.c.b16 %v381, %v368
  %v473 = vpack.c.b16 %v382, %v369
  %v474 = vpack.c.b16 %v383, %v370
  %v475 = vpack.c.b16 %v384, %v384
  %v476 = vpack.c.b16 %v385, %v385
  %v477 = vpack.c.b16 %v386, %v386
  %v478 = vpack.c.b16 %v387, %v387
  %v479 = vpack.c.b16 %v388, %v388
  %v480 = vpack.c.b16 %v389, %v389
  %v481 = vpack.c.b16 %v390, %v390
  %v482 = vpack.c.b16 %v391, %v391
  %v483 = vpack.c.b16 %v392, %v392
  %v484 = vpack.c.b16 %v393, %v393
  %v485 = vpack.c.b16 %v394, %v394
  %v486 = vpack.c.b16 %v395, %v395
  %v487 = vpack.c.b16 %v396, %v396
  %vm566 = vcmask 818176
  %v568 = vsel %vm566, %v15, 0
  %vm570 = vcmask 1041408
  %v572 = vsel %vm570, %v475, 0
  %v575 = vsel %vm570, %v476, 0
  %v578 = vsel %vm570, %v477, 0
  %v581 = vsel %vm570, %v478, 0
  %v584 = vsel %vm570, %v479, 0
  %v587 = vsel %vm570, %v480, 0
  %v590 = vsel %vm570, %v481, 0
  %v593 = vsel %vm570, %v482, 0
  %v596 = vsel %vm570, %v483, 0
  %v599 = vsel %vm570, %v484, 0
  %v602 = vsel %vm570, %v485, 0
  %v605 = vsel %vm570, %v486, 0
  %v608 = vsel %vm570, %v487, 0
  %610 = vmatpush.bf16.msra.mxu0 0
  %611 = vmatpush.bf16.msra.mxu0 %v572
  %612 = vmatpush.bf16.msra.mxu0 %v462
  %613 = vmatpush.bf16.msra.mxu0 %v449
  %614 = vmatpush.bf16.msra.mxu0 %v436
  %615 = vmatpush.bf16.msra.mxu0 %v423
  %616 = vmatpush.bf16.msra.mxu0 %v410
  %617 = vmatpush.bf16.msra.mxu0 %v397
  %618 = vmatmul.bf16.gmra.mxu0 %v568
  %v619 = vpop.f32.mrf.mxu0
  %v620 = vadd.f32 %v111, %v619
  %v621 = vpop.f32.mrf.mxu0
  %622 = vdwg.mxu0
  %623 = vmatpush.bf16.msra.mxu0 0
  %624 = vmatpush.bf16.msra.mxu0 %v575
  %625 = vmatpush.bf16.msra.mxu0 %v463
  %626 = vmatpush.bf16.msra.mxu0 %v450
  %627 = vmatpush.bf16.msra.mxu0 %v437
  %628 = vmatpush.bf16.msra.mxu0 %v424
  %629 = vmatpush.bf16.msra.mxu0 %v411
  %630 = vmatpush.bf16.msra.mxu0 %v398
  %631 = vmatmul.bf16.gmra.mxu0 %v568
  %v632 = vpop.f32.mrf.mxu0
  %v633 = vadd.f32 %v112, %v632
  %v634 = vpop.f32.mrf.mxu0
  %635 = vdwg.mxu0
  %636 = vmatpush.bf16.msra.mxu0 0
  %637 = vmatpush.bf16.msra.mxu0 %v578
  %638 = vmatpush.bf16.msra.mxu0 %v464
  %639 = vmatpush.bf16.msra.mxu0 %v451
  %640 = vmatpush.bf16.msra.mxu0 %v438
  %641 = vmatpush.bf16.msra.mxu0 %v425
  %642 = vmatpush.bf16.msra.mxu0 %v412
  %643 = vmatpush.bf16.msra.mxu0 %v399
  %644 = vmatmul.bf16.gmra.mxu0 %v568
  %v645 = vpop.f32.mrf.mxu0
  %v646 = vadd.f32 %v113, %v645
  %v647 = vpop.f32.mrf.mxu0
  %648 = vdwg.mxu0
  %649 = vmatpush.bf16.msra.mxu0 0
  %650 = vmatpush.bf16.msra.mxu0 %v581
  %651 = vmatpush.bf16.msra.mxu0 %v465
  %652 = vmatpush.bf16.msra.mxu0 %v452
  %653 = vmatpush.bf16.msra.mxu0 %v439
  %654 = vmatpush.bf16.msra.mxu0 %v426
  %655 = vmatpush.bf16.msra.mxu0 %v413
  %656 = vmatpush.bf16.msra.mxu0 %v400
  %657 = vmatmul.bf16.gmra.mxu0 %v568
  %v658 = vpop.f32.mrf.mxu0
  %v659 = vadd.f32 %v114, %v658
  %v660 = vpop.f32.mrf.mxu0
  %661 = vdwg.mxu0
  %662 = vmatpush.bf16.msra.mxu0 0
  %663 = vmatpush.bf16.msra.mxu0 %v584
  %664 = vmatpush.bf16.msra.mxu0 %v466
  %665 = vmatpush.bf16.msra.mxu0 %v453
  %666 = vmatpush.bf16.msra.mxu0 %v440
  %667 = vmatpush.bf16.msra.mxu0 %v427
  %668 = vmatpush.bf16.msra.mxu0 %v414
  %669 = vmatpush.bf16.msra.mxu0 %v401
  %670 = vmatmul.bf16.gmra.mxu0 %v568
  %v671 = vpop.f32.mrf.mxu0
  %v672 = vadd.f32 %v115, %v671
  %v673 = vpop.f32.mrf.mxu0
  %674 = vdwg.mxu0
  %675 = vmatpush.bf16.msra.mxu0 0
  %676 = vmatpush.bf16.msra.mxu0 %v587
  %677 = vmatpush.bf16.msra.mxu0 %v467
  %678 = vmatpush.bf16.msra.mxu0 %v454
  %679 = vmatpush.bf16.msra.mxu0 %v441
  %680 = vmatpush.bf16.msra.mxu0 %v428
  %681 = vmatpush.bf16.msra.mxu0 %v415
  %682 = vmatpush.bf16.msra.mxu0 %v402
  %683 = vmatmul.bf16.gmra.mxu0 %v568
  %v684 = vpop.f32.mrf.mxu0
  %v685 = vadd.f32 %v116, %v684
  %v686 = vpop.f32.mrf.mxu0
  %687 = vdwg.mxu0
  %688 = vmatpush.bf16.msra.mxu0 0
  %689 = vmatpush.bf16.msra.mxu0 %v590
  %690 = vmatpush.bf16.msra.mxu0 %v468
  %691 = vmatpush.bf16.msra.mxu0 %v455
  %692 = vmatpush.bf16.msra.mxu0 %v442
  %693 = vmatpush.bf16.msra.mxu0 %v429
  %694 = vmatpush.bf16.msra.mxu0 %v416
  %695 = vmatpush.bf16.msra.mxu0 %v403
  %696 = vmatmul.bf16.gmra.mxu0 %v568
  %v697 = vpop.f32.mrf.mxu0
  %v698 = vadd.f32 %v117, %v697
  %v699 = vpop.f32.mrf.mxu0
  %700 = vdwg.mxu0
  %701 = vmatpush.bf16.msra.mxu0 0
  %702 = vmatpush.bf16.msra.mxu0 %v593
  %703 = vmatpush.bf16.msra.mxu0 %v469
  %704 = vmatpush.bf16.msra.mxu0 %v456
  %705 = vmatpush.bf16.msra.mxu0 %v443
  %706 = vmatpush.bf16.msra.mxu0 %v430
  %707 = vmatpush.bf16.msra.mxu0 %v417
  %708 = vmatpush.bf16.msra.mxu0 %v404
  %709 = vmatmul.bf16.gmra.mxu0 %v568
  %v710 = vpop.f32.mrf.mxu0
  %v711 = vadd.f32 %v118, %v710
  %v712 = vpop.f32.mrf.mxu0
  %713 = vdwg.mxu0
  %714 = vmatpush.bf16.msra.mxu0 0
  %715 = vmatpush.bf16.msra.mxu0 %v596
  %716 = vmatpush.bf16.msra.mxu0 %v470
  %717 = vmatpush.bf16.msra.mxu0 %v457
  %718 = vmatpush.bf16.msra.mxu0 %v444
  %719 = vmatpush.bf16.msra.mxu0 %v431
  %720 = vmatpush.bf16.msra.mxu0 %v418
  %721 = vmatpush.bf16.msra.mxu0 %v405
  %722 = vmatmul.bf16.gmra.mxu0 %v568
  %v723 = vpop.f32.mrf.mxu0
  %v724 = vadd.f32 %v119, %v723
  %v725 = vpop.f32.mrf.mxu0
  %726 = vdwg.mxu0
  %727 = vmatpush.bf16.msra.mxu0 0
  %728 = vmatpush.bf16.msra.mxu0 %v599
  %729 = vmatpush.bf16.msra.mxu0 %v471
  %730 = vmatpush.bf16.msra.mxu0 %v458
  %731 = vmatpush.bf16.msra.mxu0 %v445
  %732 = vmatpush.bf16.msra.mxu0 %v432
  %733 = vmatpush.bf16.msra.mxu0 %v419
  %734 = vmatpush.bf16.msra.mxu0 %v406
  %735 = vmatmul.bf16.gmra.mxu0 %v568
  %v736 = vpop.f32.mrf.mxu0
  %v737 = vadd.f32 %v120, %v736
  %v738 = vpop.f32.mrf.mxu0
  %739 = vdwg.mxu0
  %740 = vmatpush.bf16.msra.mxu0 0
  %741 = vmatpush.bf16.msra.mxu0 %v602
  %742 = vmatpush.bf16.msra.mxu0 %v472
  %743 = vmatpush.bf16.msra.mxu0 %v459
  %744 = vmatpush.bf16.msra.mxu0 %v446
  %745 = vmatpush.bf16.msra.mxu0 %v433
  %746 = vmatpush.bf16.msra.mxu0 %v420
  %747 = vmatpush.bf16.msra.mxu0 %v407
  %748 = vmatmul.bf16.gmra.mxu0 %v568
  %v749 = vpop.f32.mrf.mxu0
  %v750 = vadd.f32 %v121, %v749
  %v751 = vpop.f32.mrf.mxu0
  %752 = vdwg.mxu0
  %753 = vmatpush.bf16.msra.mxu0 0
  %754 = vmatpush.bf16.msra.mxu0 %v605
  %755 = vmatpush.bf16.msra.mxu0 %v473
  %756 = vmatpush.bf16.msra.mxu0 %v460
  %757 = vmatpush.bf16.msra.mxu0 %v447
  %758 = vmatpush.bf16.msra.mxu0 %v434
  %759 = vmatpush.bf16.msra.mxu0 %v421
  %760 = vmatpush.bf16.msra.mxu0 %v408
  %761 = vmatmul.bf16.gmra.mxu0 %v568
  %v762 = vpop.f32.mrf.mxu0
  %v763 = vadd.f32 %v122, %v762
  %v764 = vpop.f32.mrf.mxu0
  %765 = vdwg.mxu0
  %766 = vmatpush.bf16.msra.mxu0 0
  %767 = vmatpush.bf16.msra.mxu0 %v608
  %768 = vmatpush.bf16.msra.mxu0 %v474
  %769 = vmatpush.bf16.msra.mxu0 %v461
  %770 = vmatpush.bf16.msra.mxu0 %v448
  %771 = vmatpush.bf16.msra.mxu0 %v435
  %772 = vmatpush.bf16.msra.mxu0 %v422
  %773 = vmatpush.bf16.msra.mxu0 %v409
  %774 = vmatmul.bf16.gmra.mxu0 %v568
  %v775 = vpop.f32.mrf.mxu0
  %v776 = vadd.f32 %v123, %v775
  %v777 = vpop.f32.mrf.mxu0
  %778 = vdwg.mxu0
  %v779 = vpack.c.bf16 %v633, %v620
  %v780 = vpack.c.bf16 %v659, %v646
  %v781 = vpack.c.bf16 %v685, %v672
  %v782 = vpack.c.bf16 %v711, %v698
  %v783 = vpack.c.bf16 %v737, %v724
  %v784 = vpack.c.bf16 %v763, %v750
  %v785 = vpack.c.bf16 %v776, %v776
  %v793 = vrot.slane %v779, 3
  %v794 = vrot.slane %v780, 6
  %v795 = vrot.slane %v780, 1
  %v796 = vrot.slane %v781, 4
  %v797 = vrot.slane %v781, 7
  %v798 = vrot.slane %v782, 2
  %v799 = vrot.slane %v782, 5
  %v800 = vrot.slane %v783, 3
  %v801 = vrot.slane %v784, 6
  %v802 = vrot.slane %v784, 1
  %v803 = vrot.slane %v785, 4
  %v804 = vrot.slane %v785, 7
  %vm805 = vcmask 1040384
  %v808 = vsel %vm805, %v779, %v793
  %vm809 = vcmask 1042434
  %v812 = vsel %vm809, %v794, %v795
  %v813 = vsel %vm570, %v808, %v812
  %vm814 = vcmask 1044484
  %v817 = vsel %vm814, %v796, %v797
  %vm818 = vcmask 1046534
  %v821 = vsel %vm818, %v798, %v799
  %vm822 = vcmask 1045508
  %v823 = vsel %vm822, %v817, %v821
  %vm824 = vcmask 1043456
  %v825 = vsel %vm824, %v813, %v823
  %v828 = vsel %vm805, %v783, %v800
  %v830 = vsel %vm570, %v828, %v801
  %vm831 = vcmask 1043459
  %v834 = vsel %vm831, %v802, %v803
  %vm835 = vcmask 1044483
  %v837 = vsel %vm835, %v834, %v804
  %vm838 = vcmask 1042432
  %v839 = vsel %vm838, %v830, %v837
  %842 = vst [vmem:[%s3] sm:$0xff] %v825
  %vm843 = vcmask 1041409
  %vm844 = vmor %vm843, %vm805
  %vm845 = vmor %vm809, %vm844
  %vm846 = vmor %vm831, %vm845
  %vm847 = vcmask 258052
  %vm848 = vmor %vm847, %vm846
  %849 = vst.msk [vmem:[%s3 + $0x8] sm:$0x1f] %vm848, %v839
  // Predicated region
  $region14: #{decoder_forward.3} parent=0 // pred_check
    _
  $region15: #{decoder_forward.3} parent=0 // pred_check_branch
    %851 = sbr.rel (0) target = $region17
  $region16: #{decoder_forward.3} parent=0 // pred_region
    _
  $region17: #{decoder_forward.3} parent=0 // pred_fallthru
    _
  // Predicated region
  $region18: #{decoder_forward.3} parent=0 // pred_check
    _
  $region19: #{decoder_forward.3} parent=0 // pred_check_branch
    %853 = sbr.rel (0) target = $region21
  $region20: #{decoder_forward.3} parent=0 // pred_region
    _
  $region21: #{decoder_forward.3} parent=0 // pred_fallthru
    _

// kernel: decoder_forward.4
$region0: #{decoder_forward.4}
  #allocation0 [shape = 'u32[]', space=smem, size = 0x4, offset = 0x4, fixed_abs, tag = 'smem constant byte address 0x4 - core index']
  #allocation1 [shape = 'u32[72,128]{1,0:T(1,128)}', space=vmem, size = 0x9000, scoped, tag = 'internal scratch']
  %s0 = inlined_call_operand.vmem [shape: bf16[1,2,2,128,98], index: 0, kind: input, shape index: {}]
  %s1 = inlined_call_operand.vmem [shape: bf16[2,2,16,128], index: 1, kind: input, shape index: {}]
  %s2 = inlined_call_operand.vmem [shape: f32[16,1], index: 2, kind: input, shape index: {}]
  %s3 = inlined_call_operand.vmem [shape: bf16[1,2,2,16,98], index: 3, kind: output, shape index: {}]
  %s4 = sld [smem:[#allocation0]]
  $region22: #{decoder_forward.4} parent=0
    _
  %s6 = ssub.s32 1, %s4
  %s7 = scalar_select 0, %s6, %s4
  // Predicated region
  $region2: #{decoder_forward.4} parent=0 // pred_check
    _
  $region3: #{decoder_forward.4} parent=0 // pred_check_branch
    %9 = sbr.rel (0) target = $region5
  $region4: #{decoder_forward.4} parent=0 // pred_region
    _
  $region5: #{decoder_forward.4} parent=0 // pred_fallthru
    _
  // Predicated region
  $region6: #{decoder_forward.4} parent=0 // pred_check
    _
  $region7: #{decoder_forward.4} parent=0 // pred_check_branch
    %11 = sbr.rel (0) target = $region9
  $region8: #{decoder_forward.4} parent=0 // pred_region
    _
  $region9: #{decoder_forward.4} parent=0 // pred_fallthru
    _
  // Predicated region
  $region10: #{decoder_forward.4} parent=0 // pred_check
    _
  $region11: #{decoder_forward.4} parent=0 // pred_check_branch
    %13 = sbr.rel (0) target = $region13
  $region12: #{decoder_forward.4} parent=0 // pred_region
    _
  $region13: #{decoder_forward.4} parent=0 // pred_fallthru
    _
  %v14 = vld [vmem:[%s2] sm:$0xff]
  %v15 = vld [vmem:[%s2 + $0x8] sm:$0xff]
  %v16 = vld [vmem:[%s1] sm:$0xf]
  %v17 = vld [vmem:[%s1 + $0x4] sm:$0xf]
  %v18 = vld [vmem:[%s0] sm:$0xf]
  %v19 = vld [vmem:[%s0 + $0x4] sm:$0xf]
  %v20 = vld [vmem:[%s0 + $0x8] sm:$0xf]
  %v21 = vld [vmem:[%s0 + $0xc] sm:$0xf]
  %v22 = vld [vmem:[%s0 + $0x10] sm:$0xf]
  %v23 = vld [vmem:[%s0 + $0x14] sm:$0xf]
  %v24 = vld [vmem:[%s0 + $0x18] sm:$0xf]
  %v25 = vld [vmem:[%s0 + $0x1c] sm:$0xf]
  %v26 = vld [vmem:[%s0 + $0x20] sm:$0xf]
  %v27 = vld [vmem:[%s0 + $0x24] sm:$0xf]
  %v28 = vld [vmem:[%s0 + $0x28] sm:$0xf]
  %v29 = vld [vmem:[%s0 + $0x2c] sm:$0xf]
  %v30 = vld [vmem:[%s0 + $0x30] sm:$0xf]
  %v31 = vld [vmem:[%s0 + $0x34] sm:$0xf]
  %v32 = vld [vmem:[%s0 + $0x38] sm:$0xf]
  %v33 = vld [vmem:[%s0 + $0x3c] sm:$0xf]
  %35 = vset.pattern.permute.xlu0 0
  %36 = vperm.xlu0 %35, %v14
  %v37 = vpop.permute.xlu0 %36
  %40 = vset.pattern.permute.xlu0 0
  %41 = vperm.xlu0 %40, %v15
  %v42 = vpop.permute.xlu0 %41
  %v46 = vunpack.c.l.b16 %v16
  %v47 = vunpack.c.l.b16 %v17
  %v48 = vpack.c.b16 %v47, %v46
  %v66 = vunpack.c.l.b16 %v18
  %v67 = vunpack.c.l.b16 %v19
  %v68 = vunpack.c.l.b16 %v20
  %v69 = vunpack.c.l.b16 %v21
  %v70 = vunpack.c.l.b16 %v22
  %v71 = vunpack.c.l.b16 %v23
  %v72 = vunpack.c.l.b16 %v24
  %v73 = vunpack.c.l.b16 %v25
  %v74 = vunpack.c.l.b16 %v26
  %v75 = vunpack.c.l.b16 %v27
  %v76 = vunpack.c.l.b16 %v28
  %v77 = vunpack.c.l.b16 %v29
  %v78 = vunpack.c.l.b16 %v30
  %v79 = vunpack.c.l.b16 %v31
  %v80 = vunpack.c.l.b16 %v32
  %v81 = vunpack.c.l.b16 %v33
  %v82 = vpack.c.b16 %v67, %v66
  %v83 = vpack.c.b16 %v69, %v68
  %v84 = vpack.c.b16 %v71, %v70
  %v85 = vpack.c.b16 %v73, %v72
  %v86 = vpack.c.b16 %v75, %v74
  %v87 = vpack.c.b16 %v77, %v76
  %v88 = vpack.c.b16 %v79, %v78
  %v89 = vpack.c.b16 %v81, %v80
  %98 = vmatpush.bf16.msra.mxu0 %v89
  %99 = vmatpush.bf16.msra.mxu0 %v88
  %100 = vmatpush.bf16.msra.mxu0 %v87
  %101 = vmatpush.bf16.msra.mxu0 %v86
  %102 = vmatpush.bf16.msra.mxu0 %v85
  %103 = vmatpush.bf16.msra.mxu0 %v84
  %104 = vmatpush.bf16.msra.mxu0 %v83
  %105 = vmatpush.bf16.msra.mxu0 %v82
  %106 = vmatmul.bf16.gmra.mxu0 %v48
  %v107 = vpop.f32.mrf.mxu0
  %v108 = vadd.f32 %v37, %v107
  %v109 = vpop.f32.mrf.mxu0
  %v110 = vadd.f32 %v42, %v109
  %111 = vdwg.mxu0
  %v112 = vmax.f32 %v108, 0.0
  %v113 = vmax.f32 %v110, 0.0
  %v114 = vpack.c.bf16 %v112, %v112
  %v115 = vpack.c.bf16 %v113, %v113
  %vm116 = vcmask 797696
  %117 = vst.msk [vmem:[%s3] sm:$0xf] %vm116, %v114
  %118 = vst.msk [vmem:[%s3 + $0x4] sm:$0xf] %vm116, %v115
  %s119 = scalar_lea.vmem %s1, 8
  %v120 = vld [vmem:[%s119] sm:$0xf]
  %v121 = vld [vmem:[%s119 + $0x4] sm:$0xf]
  %s122 = scalar_lea.vmem %s0, 64
  %v123 = vld [vmem:[%s122] sm:$0xf]
  %v124 = vld [vmem:[%s122 + $0x4] sm:$0xf]
  %v125 = vld [vmem:[%s122 + $0x8] sm:$0xf]
  %v126 = vld [vmem:[%s122 + $0xc] sm:$0xf]
  %v127 = vld [vmem:[%s122 + $0x10] sm:$0xf]
  %v128 = vld [vmem:[%s122 + $0x14] sm:$0xf]
  %v129 = vld [vmem:[%s122 + $0x18] sm:$0xf]
  %v130 = vld [vmem:[%s122 + $0x1c] sm:$0xf]
  %v131 = vld [vmem:[%s122 + $0x20] sm:$0xf]
  %v132 = vld [vmem:[%s122 + $0x24] sm:$0xf]
  %v133 = vld [vmem:[%s122 + $0x28] sm:$0xf]
  %v134 = vld [vmem:[%s122 + $0x2c] sm:$0xf]
  %v135 = vld [vmem:[%s122 + $0x30] sm:$0xf]
  %v136 = vld [vmem:[%s122 + $0x34] sm:$0xf]
  %v137 = vld [vmem:[%s122 + $0x38] sm:$0xf]
  %v138 = vld [vmem:[%s122 + $0x3c] sm:$0xf]
  %v141 = vunpack.c.l.b16 %v120
  %v142 = vunpack.c.l.b16 %v121
  %v143 = vpack.c.b16 %v142, %v141
  %v161 = vunpack.c.l.b16 %v123
  %v162 = vunpack.c.l.b16 %v124
  %v163 = vunpack.c.l.b16 %v125
  %v164 = vunpack.c.l.b16 %v126
  %v165 = vunpack.c.l.b16 %v127
  %v166 = vunpack.c.l.b16 %v128
  %v167 = vunpack.c.l.b16 %v129
  %v168 = vunpack.c.l.b16 %v130
  %v169 = vunpack.c.l.b16 %v131
  %v170 = vunpack.c.l.b16 %v132
  %v171 = vunpack.c.l.b16 %v133
  %v172 = vunpack.c.l.b16 %v134
  %v173 = vunpack.c.l.b16 %v135
  %v174 = vunpack.c.l.b16 %v136
  %v175 = vunpack.c.l.b16 %v137
  %v176 = vunpack.c.l.b16 %v138
  %v177 = vpack.c.b16 %v162, %v161
  %v178 = vpack.c.b16 %v164, %v163
  %v179 = vpack.c.b16 %v166, %v165
  %v180 = vpack.c.b16 %v168, %v167
  %v181 = vpack.c.b16 %v170, %v169
  %v182 = vpack.c.b16 %v172, %v171
  %v183 = vpack.c.b16 %v174, %v173
  %v184 = vpack.c.b16 %v176, %v175
  %193 = vmatpush.bf16.msra.mxu0 %v184
  %194 = vmatpush.bf16.msra.mxu0 %v183
  %195 = vmatpush.bf16.msra.mxu0 %v182
  %196 = vmatpush.bf16.msra.mxu0 %v181
  %197 = vmatpush.bf16.msra.mxu0 %v180
  %198 = vmatpush.bf16.msra.mxu0 %v179
  %199 = vmatpush.bf16.msra.mxu0 %v178
  %200 = vmatpush.bf16.msra.mxu0 %v177
  %201 = vmatmul.bf16.gmra.mxu0 %v143
  %v202 = vpop.f32.mrf.mxu0
  %v203 = vadd.f32 %v37, %v202
  %v204 = vpop.f32.mrf.mxu0
  %v205 = vadd.f32 %v42, %v204
  %206 = vdwg.mxu0
  %v207 = vmax.f32 %v203, 0.0
  %v208 = vmax.f32 %v205, 0.0
  %v209 = vpack.c.bf16 %v207, %v207
  %v210 = vpack.c.bf16 %v208, %v208
  %s211 = scalar_lea.vmem %s3, 8
  %212 = vst.msk [vmem:[%s211] sm:$0xf] %vm116, %v209
  %213 = vst.msk [vmem:[%s211 + $0x4] sm:$0xf] %vm116, %v210
  %s214 = scalar_lea.vmem %s1, 16
  %v215 = vld [vmem:[%s214] sm:$0xf]
  %v216 = vld [vmem:[%s214 + $0x4] sm:$0xf]
  %s217 = scalar_lea.vmem %s0, 128
  %v218 = vld [vmem:[%s217] sm:$0xf]
  %v219 = vld [vmem:[%s217 + $0x4] sm:$0xf]
  %v220 = vld [vmem:[%s217 + $0x8] sm:$0xf]
  %v221 = vld [vmem:[%s217 + $0xc] sm:$0xf]
  %v222 = vld [vmem:[%s217 + $0x10] sm:$0xf]
  %v223 = vld [vmem:[%s217 + $0x14] sm:$0xf]
  %v224 = vld [vmem:[%s217 + $0x18] sm:$0xf]
  %v225 = vld [vmem:[%s217 + $0x1c] sm:$0xf]
  %v226 = vld [vmem:[%s217 + $0x20] sm:$0xf]
  %v227 = vld [vmem:[%s217 + $0x24] sm:$0xf]
  %v228 = vld [vmem:[%s217 + $0x28] sm:$0xf]
  %v229 = vld [vmem:[%s217 + $0x2c] sm:$0xf]
  %v230 = vld [vmem:[%s217 + $0x30] sm:$0xf]
  %v231 = vld [vmem:[%s217 + $0x34] sm:$0xf]
  %v232 = vld [vmem:[%s217 + $0x38] sm:$0xf]
  %v233 = vld [vmem:[%s217 + $0x3c] sm:$0xf]
  %v236 = vunpack.c.l.b16 %v215
  %v237 = vunpack.c.l.b16 %v216
  %v238 = vpack.c.b16 %v237, %v236
  %v256 = vunpack.c.l.b16 %v218
  %v257 = vunpack.c.l.b16 %v219
  %v258 = vunpack.c.l.b16 %v220
  %v259 = vunpack.c.l.b16 %v221
  %v260 = vunpack.c.l.b16 %v222
  %v261 = vunpack.c.l.b16 %v223
  %v262 = vunpack.c.l.b16 %v224
  %v263 = vunpack.c.l.b16 %v225
  %v264 = vunpack.c.l.b16 %v226
  %v265 = vunpack.c.l.b16 %v227
  %v266 = vunpack.c.l.b16 %v228
  %v267 = vunpack.c.l.b16 %v229
  %v268 = vunpack.c.l.b16 %v230
  %v269 = vunpack.c.l.b16 %v231
  %v270 = vunpack.c.l.b16 %v232
  %v271 = vunpack.c.l.b16 %v233
  %v272 = vpack.c.b16 %v257, %v256
  %v273 = vpack.c.b16 %v259, %v258
  %v274 = vpack.c.b16 %v261, %v260
  %v275 = vpack.c.b16 %v263, %v262
  %v276 = vpack.c.b16 %v265, %v264
  %v277 = vpack.c.b16 %v267, %v266
  %v278 = vpack.c.b16 %v269, %v268
  %v279 = vpack.c.b16 %v271, %v270
  %288 = vmatpush.bf16.msra.mxu0 %v279
  %289 = vmatpush.bf16.msra.mxu0 %v278
  %290 = vmatpush.bf16.msra.mxu0 %v277
  %291 = vmatpush.bf16.msra.mxu0 %v276
  %292 = vmatpush.bf16.msra.mxu0 %v275
  %293 = vmatpush.bf16.msra.mxu0 %v274
  %294 = vmatpush.bf16.msra.mxu0 %v273
  %295 = vmatpush.bf16.msra.mxu0 %v272
  %296 = vmatmul.bf16.gmra.mxu0 %v238
  %v297 = vpop.f32.mrf.mxu0
  %v298 = vadd.f32 %v37, %v297
  %v299 = vpop.f32.mrf.mxu0
  %v300 = vadd.f32 %v42, %v299
  %301 = vdwg.mxu0
  %v302 = vmax.f32 %v298, 0.0
  %v303 = vmax.f32 %v300, 0.0
  %v304 = vpack.c.bf16 %v302, %v302
  %v305 = vpack.c.bf16 %v303, %v303
  %s306 = scalar_lea.vmem %s3, 16
  %307 = vst.msk [vmem:[%s306] sm:$0xf] %vm116, %v304
  %308 = vst.msk [vmem:[%s306 + $0x4] sm:$0xf] %vm116, %v305
  %s309 = scalar_lea.vmem %s1, 24
  %v310 = vld [vmem:[%s309] sm:$0xf]
  %v311 = vld [vmem:[%s309 + $0x4] sm:$0xf]
  %s312 = scalar_lea.vmem %s0, 192
  %v313 = vld [vmem:[%s312] sm:$0xf]
  %v314 = vld [vmem:[%s312 + $0x4] sm:$0xf]
  %v315 = vld [vmem:[%s312 + $0x8] sm:$0xf]
  %v316 = vld [vmem:[%s312 + $0xc] sm:$0xf]
  %v317 = vld [vmem:[%s312 + $0x10] sm:$0xf]
  %v318 = vld [vmem:[%s312 + $0x14] sm:$0xf]
  %v319 = vld [vmem:[%s312 + $0x18] sm:$0xf]
  %v320 = vld [vmem:[%s312 + $0x1c] sm:$0xf]
  %v321 = vld [vmem:[%s312 + $0x20] sm:$0xf]
  %v322 = vld [vmem:[%s312 + $0x24] sm:$0xf]
  %v323 = vld [vmem:[%s312 + $0x28] sm:$0xf]
  %v324 = vld [vmem:[%s312 + $0x2c] sm:$0xf]
  %v325 = vld [vmem:[%s312 + $0x30] sm:$0xf]
  %v326 = vld [vmem:[%s312 + $0x34] sm:$0xf]
  %v327 = vld [vmem:[%s312 + $0x38] sm:$0xf]
  %v328 = vld [vmem:[%s312 + $0x3c] sm:$0xf]
  %v331 = vunpack.c.l.b16 %v310
  %v332 = vunpack.c.l.b16 %v311
  %v333 = vpack.c.b16 %v332, %v331
  %v351 = vunpack.c.l.b16 %v313
  %v352 = vunpack.c.l.b16 %v314
  %v353 = vunpack.c.l.b16 %v315
  %v354 = vunpack.c.l.b16 %v316
  %v355 = vunpack.c.l.b16 %v317
  %v356 = vunpack.c.l.b16 %v318
  %v357 = vunpack.c.l.b16 %v319
  %v358 = vunpack.c.l.b16 %v320
  %v359 = vunpack.c.l.b16 %v321
  %v360 = vunpack.c.l.b16 %v322
  %v361 = vunpack.c.l.b16 %v323
  %v362 = vunpack.c.l.b16 %v324
  %v363 = vunpack.c.l.b16 %v325
  %v364 = vunpack.c.l.b16 %v326
  %v365 = vunpack.c.l.b16 %v327
  %v366 = vunpack.c.l.b16 %v328
  %v367 = vpack.c.b16 %v352, %v351
  %v368 = vpack.c.b16 %v354, %v353
  %v369 = vpack.c.b16 %v356, %v355
  %v370 = vpack.c.b16 %v358, %v357
  %v371 = vpack.c.b16 %v360, %v359
  %v372 = vpack.c.b16 %v362, %v361
  %v373 = vpack.c.b16 %v364, %v363
  %v374 = vpack.c.b16 %v366, %v365
  %383 = vmatpush.bf16.msra.mxu0 %v374
  %384 = vmatpush.bf16.msra.mxu0 %v373
  %385 = vmatpush.bf16.msra.mxu0 %v372
  %386 = vmatpush.bf16.msra.mxu0 %v371
  %387 = vmatpush.bf16.msra.mxu0 %v370
  %388 = vmatpush.bf16.msra.mxu0 %v369
  %389 = vmatpush.bf16.msra.mxu0 %v368
  %390 = vmatpush.bf16.msra.mxu0 %v367
  %391 = vmatmul.bf16.gmra.mxu0 %v333
  %v392 = vpop.f32.mrf.mxu0
  %v393 = vadd.f32 %v37, %v392
  %v394 = vpop.f32.mrf.mxu0
  %v395 = vadd.f32 %v42, %v394
  %396 = vdwg.mxu0
  %v397 = vmax.f32 %v393, 0.0
  %v398 = vmax.f32 %v395, 0.0
  %v399 = vpack.c.bf16 %v397, %v397
  %v400 = vpack.c.bf16 %v398, %v398
  %s401 = scalar_lea.vmem %s3, 24
  %402 = vst.msk [vmem:[%s401] sm:$0xf] %vm116, %v399
  %403 = vst.msk [vmem:[%s401 + $0x4] sm:$0xf] %vm116, %v400
  // Predicated region
  $region14: #{decoder_forward.4} parent=0 // pred_check
    _
  $region15: #{decoder_forward.4} parent=0 // pred_check_branch
    %405 = sbr.rel (0) target = $region17
  $region16: #{decoder_forward.4} parent=0 // pred_region
    _
  $region17: #{decoder_forward.4} parent=0 // pred_fallthru
    _
  // Predicated region
  $region18: #{decoder_forward.4} parent=0 // pred_check
    _
  $region19: #{decoder_forward.4} parent=0 // pred_check_branch
    %407 = sbr.rel (0) target = $region21
  $region20: #{decoder_forward.4} parent=0 // pred_region
    _
  $region21: #{decoder_forward.4} parent=0 // pred_fallthru
    _

// kernel: decoder_forward.5
$region0: #{decoder_forward.5}
  #allocation0 [shape = 'u32[]', space=smem, size = 0x4, offset = 0x4, fixed_abs, tag = 'smem constant byte address 0x4 - core index']
  #allocation1 [shape = 'u32[72,128]{1,0:T(1,128)}', space=vmem, size = 0x9000, scoped, tag = 'internal scratch']
  #allocation2 [shape = 'f32[1,1]{1,0:T(1,128)S(1)}', space=vmem, size = 0x200, scoped, tag = 'scoped memory for decoder_forward.5']
  %s0 = inlined_call_operand.vmem [shape: bf16[1,2,2,64,392], index: 0, kind: input, shape index: {}]
  %s1 = inlined_call_operand.vmem [shape: bf16[2,2,1,64], index: 1, kind: input, shape index: {}]
  %s2 = inlined_call_operand.<no memory space> [shape: f32[1,1], index: 2, kind: input, shape index: {}]
  %s3 = inlined_call_operand.vmem [shape: f32[1,2,2,1,392], index: 3, kind: output, shape index: {}]
  %s4 = sld [smem:[#allocation0]]
  $region22: #{decoder_forward.5} parent=0
    _
  %s6 = ssub.s32 1, %s4
  %s7 = scalar_select 0, %s6, %s4
  %v8 = vstv %s2
  %9 = vst [vmem:[#allocation2] sm:$0x1] %v8
  // Predicated region
  $region2: #{decoder_forward.5} parent=0 // pred_check
    _
  $region3: #{decoder_forward.5} parent=0 // pred_check_branch
    %11 = sbr.rel (0) target = $region5
  $region4: #{decoder_forward.5} parent=0 // pred_region
    _
  $region5: #{decoder_forward.5} parent=0 // pred_fallthru
    _
  // Predicated region
  $region6: #{decoder_forward.5} parent=0 // pred_check
    _
  $region7: #{decoder_forward.5} parent=0 // pred_check_branch
    %13 = sbr.rel (0) target = $region9
  $region8: #{decoder_forward.5} parent=0 // pred_region
    _
  $region9: #{decoder_forward.5} parent=0 // pred_fallthru
    _
  // Predicated region
  $region10: #{decoder_forward.5} parent=0 // pred_check
    _
  $region11: #{decoder_forward.5} parent=0 // pred_check_branch
    %15 = sbr.rel (0) target = $region13
  $region12: #{decoder_forward.5} parent=0 // pred_region
    _
  $region13: #{decoder_forward.5} parent=0 // pred_fallthru
    _
  %v17 = vld [vmem:[#allocation2] sm:$0x1]
  %v18 = vld [vmem:[%s1] sm:$0x1]
  %v19 = vld [vmem:[%s0] sm:$0xff]
  %v20 = vld [vmem:[%s0 + $0x8] sm:$0xff]
  %v21 = vld [vmem:[%s0 + $0x10] sm:$0xff]
  %v22 = vld [vmem:[%s0 + $0x18] sm:$0xff]
  %v23 = vld [vmem:[%s0 + $0x20] sm:$0xff]
  %v24 = vld [vmem:[%s0 + $0x28] sm:$0xff]
  %v25 = vld [vmem:[%s0 + $0x30] sm:$0xff]
  %v26 = vld [vmem:[%s0 + $0x38] sm:$0xff]
  %v27 = vld [vmem:[%s0 + $0x40] sm:$0xff]
  %v28 = vld [vmem:[%s0 + $0x48] sm:$0xff]
  %v29 = vld [vmem:[%s0 + $0x50] sm:$0xff]
  %v30 = vld [vmem:[%s0 + $0x58] sm:$0xff]
  %v31 = vld [vmem:[%s0 + $0x60] sm:$0xff]
  %v32 = vld [vmem:[%s0 + $0x68] sm:$0xff]
  %v33 = vld [vmem:[%s0 + $0x70] sm:$0xff]
  %v34 = vld [vmem:[%s0 + $0x78] sm:$0xff]
  %36 = vset.pattern.permute.xlu0 0
  %37 = vperm.xlu0 %36, %v17
  %v38 = vpop.permute.xlu0 %37
  %v40 = vperm.slane %v38, 0
  %v57 = vunpack.c.l.b16 %v19
  %v58 = vunpack.c.h.b16 %v19
  %v59 = vunpack.c.l.b16 %v20
  %v60 = vunpack.c.h.b16 %v20
  %v61 = vunpack.c.l.b16 %v21
  %v62 = vunpack.c.h.b16 %v21
  %v63 = vunpack.c.l.b16 %v22
  %v64 = vunpack.c.h.b16 %v22
  %v65 = vunpack.c.l.b16 %v23
  %v66 = vunpack.c.h.b16 %v23
  %v67 = vunpack.c.l.b16 %v24
  %v68 = vunpack.c.h.b16 %v24
  %v69 = vunpack.c.l.b16 %v25
  %v70 = vunpack.c.h.b16 %v25
  %v71 = vunpack.c.l.b16 %v26
  %v72 = vunpack.c.h.b16 %v26
  %v73 = vunpack.c.l.b16 %v27
  %v74 = vunpack.c.h.b16 %v27
  %v75 = vunpack.c.l.b16 %v28
  %v76 = vunpack.c.h.b16 %v28
  %v77 = vunpack.c.l.b16 %v29
  %v78 = vunpack.c.h.b16 %v29
  %v79 = vunpack.c.l.b16 %v30
  %v80 = vunpack.c.h.b16 %v30
  %v81 = vunpack.c.l.b16 %v31
  %v82 = vunpack.c.h.b16 %v31
  %v83 = vunpack.c.l.b16 %v32
  %v84 = vunpack.c.h.b16 %v32
  %v85 = vunpack.c.l.b16 %v33
  %v86 = vunpack.c.h.b16 %v33
  %v87 = vunpack.c.l.b16 %v34
  %v88 = vunpack.c.h.b16 %v34
  %v89 = vpack.c.b16 %v61, %v57
  %v90 = vpack.c.b16 %v62, %v58
  %v91 = vpack.c.b16 %v63, %v59
  %v92 = vpack.c.b16 %v64, %v60
  %v93 = vpack.c.b16 %v69, %v65
  %v94 = vpack.c.b16 %v70, %v66
  %v95 = vpack.c.b16 %v71, %v67
  %v96 = vpack.c.b16 %v72, %v68
  %v97 = vpack.c.b16 %v77, %v73
  %v98 = vpack.c.b16 %v78, %v74
  %v99 = vpack.c.b16 %v79, %v75
  %v100 = vpack.c.b16 %v80, %v76
  %v101 = vpack.c.b16 %v85, %v81
  %v102 = vpack.c.b16 %v86, %v82
  %v103 = vpack.c.b16 %v87, %v83
  %v104 = vpack.c.b16 %v88, %v84
  %vm121 = vcmask 523264
  %v123 = vsel %vm121, %v18, 0
  %125 = vmatpush.bf16.msra.mxu0 0
  %126 = vmatpush.bf16.msra.mxu0 0
  %127 = vmatpush.bf16.msra.mxu0 0
  %128 = vmatpush.bf16.msra.mxu0 0
  %129 = vmatpush.bf16.msra.mxu0 %v101
  %130 = vmatpush.bf16.msra.mxu0 %v97
  %131 = vmatpush.bf16.msra.mxu0 %v93
  %132 = vmatpush.bf16.msra.mxu0 %v89
  %133 = vmatmul.bf16.gmra.mxu0 %v123
  %v134 = vpop.f32.mrf.mxu0
  %v135 = vadd.f32 %v40, %v134
  %v136 = vpop.f32.mrf.mxu0
  %137 = vdwg.mxu0
  %138 = vmatpush.bf16.msra.mxu0 0
  %139 = vmatpush.bf16.msra.mxu0 0
  %140 = vmatpush.bf16.msra.mxu0 0
  %141 = vmatpush.bf16.msra.mxu0 0
  %142 = vmatpush.bf16.msra.mxu0 %v102
  %143 = vmatpush.bf16.msra.mxu0 %v98
  %144 = vmatpush.bf16.msra.mxu0 %v94
  %145 = vmatpush.bf16.msra.mxu0 %v90
  %146 = vmatmul.bf16.gmra.mxu0 %v123
  %v147 = vpop.f32.mrf.mxu0
  %v148 = vadd.f32 %v40, %v147
  %v149 = vpop.f32.mrf.mxu0
  %150 = vdwg.mxu0
  %151 = vmatpush.bf16.msra.mxu0 0
  %152 = vmatpush.bf16.msra.mxu0 0
  %153 = vmatpush.bf16.msra.mxu0 0
  %154 = vmatpush.bf16.msra.mxu0 0
  %155 = vmatpush.bf16.msra.mxu0 %v103
  %156 = vmatpush.bf16.msra.mxu0 %v99
  %157 = vmatpush.bf16.msra.mxu0 %v95
  %158 = vmatpush.bf16.msra.mxu0 %v91
  %159 = vmatmul.bf16.gmra.mxu0 %v123
  %v160 = vpop.f32.mrf.mxu0
  %v161 = vadd.f32 %v40, %v160
  %v162 = vpop.f32.mrf.mxu0
  %163 = vdwg.mxu0
  %164 = vmatpush.bf16.msra.mxu0 0
  %165 = vmatpush.bf16.msra.mxu0 0
  %166 = vmatpush.bf16.msra.mxu0 0
  %167 = vmatpush.bf16.msra.mxu0 0
  %168 = vmatpush.bf16.msra.mxu0 %v104
  %169 = vmatpush.bf16.msra.mxu0 %v100
  %170 = vmatpush.bf16.msra.mxu0 %v96
  %171 = vmatpush.bf16.msra.mxu0 %v92
  %172 = vmatmul.bf16.gmra.mxu0 %v123
  %v173 = vpop.f32.mrf.mxu0
  %v174 = vadd.f32 %v40, %v173
  %v175 = vpop.f32.mrf.mxu0
  %176 = vdwg.mxu0
  %v177 = vsub.f32 0.0, %v135
  %v178 = vsub.f32 0.0, %v148
  %v179 = vsub.f32 0.0, %v161
  %v180 = vsub.f32 0.0, %v174
  %v181 = vmul.f32 %v177, 1.442695
  %v182 = vpow.pop %v181
  %v183 = vmul.f32 %v178, 1.442695
  %v184 = vpow.pop %v183
  %v185 = vmul.f32 %v179, 1.442695
  %v186 = vpow.pop %v185
  %v187 = vmul.f32 %v180, 1.442695
  %v188 = vpow.pop %v187
  %v189 = vadd.f32 %v182, 1.0
  %v190 = vadd.f32 %v184, 1.0
  %v191 = vadd.f32 %v186, 1.0
  %v192 = vadd.f32 %v188, 1.0
  %v193 = vrcp.pop %v189
  %v194 = vmul.f32 %v189, %v193
  %v195 = vsub.f32 1.0, %v194
  %v196 = vmul.f32 %v193, %v195
  %v197 = vadd.f32 %v193, %v196
  %vm198 = vweird.f32 %v189
  %vm199 = vweird.f32 %v193
  %vm200 = vmor %vm198, %vm199
  %v201 = vsel %vm200, %v193, %v197
  %v202 = vand.u32 2147483647, %v189
  %vm203 = vcmp.eq.f32.partialorder %v202, 8.507059e+37
  %v204 = vand.u32 %v189, 2147483648
  %v205 = vor.u32 1.1754944e-38, %v204
  %v206 = vsel %vm203, %v205, %v201
  %v207 = vmul.f32 1.0, %v206
  %v208 = vrcp.pop %v190
  %v209 = vmul.f32 %v190, %v208
  %v210 = vsub.f32 1.0, %v209
  %v211 = vmul.f32 %v208, %v210
  %v212 = vadd.f32 %v208, %v211
  %vm213 = vweird.f32 %v190
  %vm214 = vweird.f32 %v208
  %vm215 = vmor %vm213, %vm214
  %v216 = vsel %vm215, %v208, %v212
  %v217 = vand.u32 2147483647, %v190
  %vm218 = vcmp.eq.f32.partialorder %v217, 8.507059e+37
  %v219 = vand.u32 %v190, 2147483648
  %v220 = vor.u32 1.1754944e-38, %v219
  %v221 = vsel %vm218, %v220, %v216
  %v222 = vmul.f32 1.0, %v221
  %v223 = vrcp.pop %v191
  %v224 = vmul.f32 %v191, %v223
  %v225 = vsub.f32 1.0, %v224
  %v226 = vmul.f32 %v223, %v225
  %v227 = vadd.f32 %v223, %v226
  %vm228 = vweird.f32 %v191
  %vm229 = vweird.f32 %v223
  %vm230 = vmor %vm228, %vm229
  %v231 = vsel %vm230, %v223, %v227
  %v232 = vand.u32 2147483647, %v191
  %vm233 = vcmp.eq.f32.partialorder %v232, 8.507059e+37
  %v234 = vand.u32 %v191, 2147483648
  %v235 = vor.u32 1.1754944e-38, %v234
  %v236 = vsel %vm233, %v235, %v231
  %v237 = vmul.f32 1.0, %v236
  %v238 = vrcp.pop %v192
  %v239 = vmul.f32 %v192, %v238
  %v240 = vsub.f32 1.0, %v239
  %v241 = vmul.f32 %v238, %v240
  %v242 = vadd.f32 %v238, %v241
  %vm243 = vweird.f32 %v192
  %vm244 = vweird.f32 %v238
  %vm245 = vmor %vm243, %vm244
  %v246 = vsel %vm245, %v238, %v242
  %v247 = vand.u32 2147483647, %v192
  %vm248 = vcmp.eq.f32.partialorder %v247, 8.507059e+37
  %v249 = vand.u32 %v192, 2147483648
  %v250 = vor.u32 1.1754944e-38, %v249
  %v251 = vsel %vm248, %v250, %v246
  %v252 = vmul.f32 1.0, %v251
  %v257 = vrot.slane %v222, 7
  %v258 = vrot.slane %v237, 6
  %v259 = vrot.slane %v252, 5
  %vm260 = vcmask 1040384
  %v261 = vsel %vm260, %v207, %v257
  %vm262 = vcmask 1042434
  %v263 = vsel %vm262, %v258, %v259
  %vm264 = vcmask 1041408
  %v265 = vsel %vm264, %v261, %v263
  %v267 = vlaneseq
  %vm268 = vcmp.ge.s32.totalorder %v267, 0
  %vm269 = vcmp.lt.s32.totalorder %v267, 392
  %vm270 = vmand %vm268, %vm269
  %271 = vst.msk [vmem:[%s3] sm:$0xf] %vm270, %v265
  %s272 = scalar_lea.vmem %s1, 1
  %v273 = vld [vmem:[%s272] sm:$0x1]
  %s274 = scalar_lea.vmem %s0, 128
  %v275 = vld [vmem:[%s274] sm:$0xff]
  %v276 = vld [vmem:[%s274 + $0x8] sm:$0xff]
  %v277 = vld [vmem:[%s274 + $0x10] sm:$0xff]
  %v278 = vld [vmem:[%s274 + $0x18] sm:$0xff]
  %v279 = vld [vmem:[%s274 + $0x20] sm:$0xff]
  %v280 = vld [vmem:[%s274 + $0x28] sm:$0xff]
  %v281 = vld [vmem:[%s274 + $0x30] sm:$0xff]
  %v282 = vld [vmem:[%s274 + $0x38] sm:$0xff]
  %v283 = vld [vmem:[%s274 + $0x40] sm:$0xff]
  %v284 = vld [vmem:[%s274 + $0x48] sm:$0xff]
  %v285 = vld [vmem:[%s274 + $0x50] sm:$0xff]
  %v286 = vld [vmem:[%s274 + $0x58] sm:$0xff]
  %v287 = vld [vmem:[%s274 + $0x60] sm:$0xff]
  %v288 = vld [vmem:[%s274 + $0x68] sm:$0xff]
  %v289 = vld [vmem:[%s274 + $0x70] sm:$0xff]
  %v290 = vld [vmem:[%s274 + $0x78] sm:$0xff]
  %v307 = vunpack.c.l.b16 %v275
  %v308 = vunpack.c.h.b16 %v275
  %v309 = vunpack.c.l.b16 %v276
  %v310 = vunpack.c.h.b16 %v276
  %v311 = vunpack.c.l.b16 %v277
  %v312 = vunpack.c.h.b16 %v277
  %v313 = vunpack.c.l.b16 %v278
  %v314 = vunpack.c.h.b16 %v278
  %v315 = vunpack.c.l.b16 %v279
  %v316 = vunpack.c.h.b16 %v279
  %v317 = vunpack.c.l.b16 %v280
  %v318 = vunpack.c.h.b16 %v280
  %v319 = vunpack.c.l.b16 %v281
  %v320 = vunpack.c.h.b16 %v281
  %v321 = vunpack.c.l.b16 %v282
  %v322 = vunpack.c.h.b16 %v282
  %v323 = vunpack.c.l.b16 %v283
  %v324 = vunpack.c.h.b16 %v283
  %v325 = vunpack.c.l.b16 %v284
  %v326 = vunpack.c.h.b16 %v284
  %v327 = vunpack.c.l.b16 %v285
  %v328 = vunpack.c.h.b16 %v285
  %v329 = vunpack.c.l.b16 %v286
  %v330 = vunpack.c.h.b16 %v286
  %v331 = vunpack.c.l.b16 %v287
  %v332 = vunpack.c.h.b16 %v287
  %v333 = vunpack.c.l.b16 %v288
  %v334 = vunpack.c.h.b16 %v288
  %v335 = vunpack.c.l.b16 %v289
  %v336 = vunpack.c.h.b16 %v289
  %v337 = vunpack.c.l.b16 %v290
  %v338 = vunpack.c.h.b16 %v290
  %v339 = vpack.c.b16 %v311, %v307
  %v340 = vpack.c.b16 %v312, %v308
  %v341 = vpack.c.b16 %v313, %v309
  %v342 = vpack.c.b16 %v314, %v310
  %v343 = vpack.c.b16 %v319, %v315
  %v344 = vpack.c.b16 %v320, %v316
  %v345 = vpack.c.b16 %v321, %v317
  %v346 = vpack.c.b16 %v322, %v318
  %v347 = vpack.c.b16 %v327, %v323
  %v348 = vpack.c.b16 %v328, %v324
  %v349 = vpack.c.b16 %v329, %v325
  %v350 = vpack.c.b16 %v330, %v326
  %v351 = vpack.c.b16 %v335, %v331
  %v352 = vpack.c.b16 %v336, %v332
  %v353 = vpack.c.b16 %v337, %v333
  %v354 = vpack.c.b16 %v338, %v334
  %v372 = vsel %vm121, %v273, 0
  %374 = vmatpush.bf16.msra.mxu0 0
  %375 = vmatpush.bf16.msra.mxu0 0
  %376 = vmatpush.bf16.msra.mxu0 0
  %377 = vmatpush.bf16.msra.mxu0 0
  %378 = vmatpush.bf16.msra.mxu0 %v351
  %379 = vmatpush.bf16.msra.mxu0 %v347
  %380 = vmatpush.bf16.msra.mxu0 %v343
  %381 = vmatpush.bf16.msra.mxu0 %v339
  %382 = vmatmul.bf16.gmra.mxu0 %v372
  %v383 = vpop.f32.mrf.mxu0
  %v384 = vadd.f32 %v40, %v383
  %v385 = vpop.f32.mrf.mxu0
  %386 = vdwg.mxu0
  %387 = vmatpush.bf16.msra.mxu0 0
  %388 = vmatpush.bf16.msra.mxu0 0
  %389 = vmatpush.bf16.msra.mxu0 0
  %390 = vmatpush.bf16.msra.mxu0 0
  %391 = vmatpush.bf16.msra.mxu0 %v352
  %392 = vmatpush.bf16.msra.mxu0 %v348
  %393 = vmatpush.bf16.msra.mxu0 %v344
  %394 = vmatpush.bf16.msra.mxu0 %v340
  %395 = vmatmul.bf16.gmra.mxu0 %v372
  %v396 = vpop.f32.mrf.mxu0
  %v397 = vadd.f32 %v40, %v396
  %v398 = vpop.f32.mrf.mxu0
  %399 = vdwg.mxu0
  %400 = vmatpush.bf16.msra.mxu0 0
  %401 = vmatpush.bf16.msra.mxu0 0
  %402 = vmatpush.bf16.msra.mxu0 0
  %403 = vmatpush.bf16.msra.mxu0 0
  %404 = vmatpush.bf16.msra.mxu0 %v353
  %405 = vmatpush.bf16.msra.mxu0 %v349
  %406 = vmatpush.bf16.msra.mxu0 %v345
  %407 = vmatpush.bf16.msra.mxu0 %v341
  %408 = vmatmul.bf16.gmra.mxu0 %v372
  %v409 = vpop.f32.mrf.mxu0
  %v410 = vadd.f32 %v40, %v409
  %v411 = vpop.f32.mrf.mxu0
  %412 = vdwg.mxu0
  %413 = vmatpush.bf16.msra.mxu0 0
  %414 = vmatpush.bf16.msra.mxu0 0
  %415 = vmatpush.bf16.msra.mxu0 0
  %416 = vmatpush.bf16.msra.mxu0 0
  %417 = vmatpush.bf16.msra.mxu0 %v354
  %418 = vmatpush.bf16.msra.mxu0 %v350
  %419 = vmatpush.bf16.msra.mxu0 %v346
  %420 = vmatpush.bf16.msra.mxu0 %v342
  %421 = vmatmul.bf16.gmra.mxu0 %v372
  %v422 = vpop.f32.mrf.mxu0
  %v423 = vadd.f32 %v40, %v422
  %v424 = vpop.f32.mrf.mxu0
  %425 = vdwg.mxu0
  %v426 = vsub.f32 0.0, %v384
  %v427 = vsub.f32 0.0, %v397
  %v428 = vsub.f32 0.0, %v410
  %v429 = vsub.f32 0.0, %v423
  %v430 = vmul.f32 %v426, 1.442695
  %v431 = vpow.pop %v430
  %v432 = vmul.f32 %v427, 1.442695
  %v433 = vpow.pop %v432
  %v434 = vmul.f32 %v428, 1.442695
  %v435 = vpow.pop %v434
  %v436 = vmul.f32 %v429, 1.442695
  %v437 = vpow.pop %v436
  %v438 = vadd.f32 %v431, 1.0
  %v439 = vadd.f32 %v433, 1.0
  %v440 = vadd.f32 %v435, 1.0
  %v441 = vadd.f32 %v437, 1.0
  %v442 = vrcp.pop %v438
  %v443 = vmul.f32 %v438, %v442
  %v444 = vsub.f32 1.0, %v443
  %v445 = vmul.f32 %v442, %v444
  %v446 = vadd.f32 %v442, %v445
  %vm447 = vweird.f32 %v438
  %vm448 = vweird.f32 %v442
  %vm449 = vmor %vm447, %vm448
  %v450 = vsel %vm449, %v442, %v446
  %v451 = vand.u32 2147483647, %v438
  %vm452 = vcmp.eq.f32.partialorder %v451, 8.507059e+37
  %v453 = vand.u32 %v438, 2147483648
  %v454 = vor.u32 1.1754944e-38, %v453
  %v455 = vsel %vm452, %v454, %v450
  %v456 = vmul.f32 1.0, %v455
  %v457 = vrcp.pop %v439
  %v458 = vmul.f32 %v439, %v457
  %v459 = vsub.f32 1.0, %v458
  %v460 = vmul.f32 %v457, %v459
  %v461 = vadd.f32 %v457, %v460
  %vm462 = vweird.f32 %v439
  %vm463 = vweird.f32 %v457
  %vm464 = vmor %vm462, %vm463
  %v465 = vsel %vm464, %v457, %v461
  %v466 = vand.u32 2147483647, %v439
  %vm467 = vcmp.eq.f32.partialorder %v466, 8.507059e+37
  %v468 = vand.u32 %v439, 2147483648
  %v469 = vor.u32 1.1754944e-38, %v468
  %v470 = vsel %vm467, %v469, %v465
  %v471 = vmul.f32 1.0, %v470
  %v472 = vrcp.pop %v440
  %v473 = vmul.f32 %v440, %v472
  %v474 = vsub.f32 1.0, %v473
  %v475 = vmul.f32 %v472, %v474
  %v476 = vadd.f32 %v472, %v475
  %vm477 = vweird.f32 %v440
  %vm478 = vweird.f32 %v472
  %vm479 = vmor %vm477, %vm478
  %v480 = vsel %vm479, %v472, %v476
  %v481 = vand.u32 2147483647, %v440
  %vm482 = vcmp.eq.f32.partialorder %v481, 8.507059e+37
  %v483 = vand.u32 %v440, 2147483648
  %v484 = vor.u32 1.1754944e-38, %v483
  %v485 = vsel %vm482, %v484, %v480
  %v486 = vmul.f32 1.0, %v485
  %v487 = vrcp.pop %v441
  %v488 = vmul.f32 %v441, %v487
  %v489 = vsub.f32 1.0, %v488
  %v490 = vmul.f32 %v487, %v489
  %v491 = vadd.f32 %v487, %v490
  %vm492 = vweird.f32 %v441
  %vm493 = vweird.f32 %v487
  %vm494 = vmor %vm492, %vm493
  %v495 = vsel %vm494, %v487, %v491
  %v496 = vand.u32 2147483647, %v441
  %vm497 = vcmp.eq.f32.partialorder %v496, 8.507059e+37
  %v498 = vand.u32 %v441, 2147483648
  %v499 = vor.u32 1.1754944e-38, %v498
  %v500 = vsel %vm497, %v499, %v495
  %v501 = vmul.f32 1.0, %v500
  %v506 = vrot.slane %v471, 7
  %v507 = vrot.slane %v486, 6
  %v508 = vrot.slane %v501, 5
  %v509 = vsel %vm260, %v456, %v506
  %v510 = vsel %vm262, %v507, %v508
  %v511 = vsel %vm264, %v509, %v510
  %s513 = scalar_lea.vmem %s3, 4
  %514 = vst.msk [vmem:[%s513] sm:$0xf] %vm270, %v511
  %s515 = scalar_lea.vmem %s1, 2
  %v516 = vld [vmem:[%s515] sm:$0x1]
  %s517 = scalar_lea.vmem %s0, 256
  %v518 = vld [vmem:[%s517] sm:$0xff]
  %v519 = vld [vmem:[%s517 + $0x8] sm:$0xff]
  %v520 = vld [vmem:[%s517 + $0x10] sm:$0xff]
  %v521 = vld [vmem:[%s517 + $0x18] sm:$0xff]
  %v522 = vld [vmem:[%s517 + $0x20] sm:$0xff]
  %v523 = vld [vmem:[%s517 + $0x28] sm:$0xff]
  %v524 = vld [vmem:[%s517 + $0x30] sm:$0xff]
  %v525 = vld [vmem:[%s517 + $0x38] sm:$0xff]
  %v526 = vld [vmem:[%s517 + $0x40] sm:$0xff]
  %v527 = vld [vmem:[%s517 + $0x48] sm:$0xff]
  %v528 = vld [vmem:[%s517 + $0x50] sm:$0xff]
  %v529 = vld [vmem:[%s517 + $0x58] sm:$0xff]
  %v530 = vld [vmem:[%s517 + $0x60] sm:$0xff]
  %v531 = vld [vmem:[%s517 + $0x68] sm:$0xff]
  %v532 = vld [vmem:[%s517 + $0x70] sm:$0xff]
  %v533 = vld [vmem:[%s517 + $0x78] sm:$0xff]
  %v550 = vunpack.c.l.b16 %v518
  %v551 = vunpack.c.h.b16 %v518
  %v552 = vunpack.c.l.b16 %v519
  %v553 = vunpack.c.h.b16 %v519
  %v554 = vunpack.c.l.b16 %v520
  %v555 = vunpack.c.h.b16 %v520
  %v556 = vunpack.c.l.b16 %v521
  %v557 = vunpack.c.h.b16 %v521
  %v558 = vunpack.c.l.b16 %v522
  %v559 = vunpack.c.h.b16 %v522
  %v560 = vunpack.c.l.b16 %v523
  %v561 = vunpack.c.h.b16 %v523
  %v562 = vunpack.c.l.b16 %v524
  %v563 = vunpack.c.h.b16 %v524
  %v564 = vunpack.c.l.b16 %v525
  %v565 = vunpack.c.h.b16 %v525
  %v566 = vunpack.c.l.b16 %v526
  %v567 = vunpack.c.h.b16 %v526
  %v568 = vunpack.c.l.b16 %v527
  %v569 = vunpack.c.h.b16 %v527
  %v570 = vunpack.c.l.b16 %v528
  %v571 = vunpack.c.h.b16 %v528
  %v572 = vunpack.c.l.b16 %v529
  %v573 = vunpack.c.h.b16 %v529
  %v574 = vunpack.c.l.b16 %v530
  %v575 = vunpack.c.h.b16 %v530
  %v576 = vunpack.c.l.b16 %v531
  %v577 = vunpack.c.h.b16 %v531
  %v578 = vunpack.c.l.b16 %v532
  %v579 = vunpack.c.h.b16 %v532
  %v580 = vunpack.c.l.b16 %v533
  %v581 = vunpack.c.h.b16 %v533
  %v582 = vpack.c.b16 %v554, %v550
  %v583 = vpack.c.b16 %v555, %v551
  %v584 = vpack.c.b16 %v556, %v552
  %v585 = vpack.c.b16 %v557, %v553
  %v586 = vpack.c.b16 %v562, %v558
  %v587 = vpack.c.b16 %v563, %v559
  %v588 = vpack.c.b16 %v564, %v560
  %v589 = vpack.c.b16 %v565, %v561
  %v590 = vpack.c.b16 %v570, %v566
  %v591 = vpack.c.b16 %v571, %v567
  %v592 = vpack.c.b16 %v572, %v568
  %v593 = vpack.c.b16 %v573, %v569
  %v594 = vpack.c.b16 %v578, %v574
  %v595 = vpack.c.b16 %v579, %v575
  %v596 = vpack.c.b16 %v580, %v576
  %v597 = vpack.c.b16 %v581, %v577
  %v615 = vsel %vm121, %v516, 0
  %617 = vmatpush.bf16.msra.mxu0 0
  %618 = vmatpush.bf16.msra.mxu0 0
  %619 = vmatpush.bf16.msra.mxu0 0
  %620 = vmatpush.bf16.msra.mxu0 0
  %621 = vmatpush.bf16.msra.mxu0 %v594
  %622 = vmatpush.bf16.msra.mxu0 %v590
  %623 = vmatpush.bf16.msra.mxu0 %v586
  %624 = vmatpush.bf16.msra.mxu0 %v582
  %625 = vmatmul.bf16.gmra.mxu0 %v615
  %v626 = vpop.f32.mrf.mxu0
  %v627 = vadd.f32 %v40, %v626
  %v628 = vpop.f32.mrf.mxu0
  %629 = vdwg.mxu0
  %630 = vmatpush.bf16.msra.mxu0 0
  %631 = vmatpush.bf16.msra.mxu0 0
  %632 = vmatpush.bf16.msra.mxu0 0
  %633 = vmatpush.bf16.msra.mxu0 0
  %634 = vmatpush.bf16.msra.mxu0 %v595
  %635 = vmatpush.bf16.msra.mxu0 %v591
  %636 = vmatpush.bf16.msra.mxu0 %v587
  %637 = vmatpush.bf16.msra.mxu0 %v583
  %638 = vmatmul.bf16.gmra.mxu0 %v615
  %v639 = vpop.f32.mrf.mxu0
  %v640 = vadd.f32 %v40, %v639
  %v641 = vpop.f32.mrf.mxu0
  %642 = vdwg.mxu0
  %643 = vmatpush.bf16.msra.mxu0 0
  %644 = vmatpush.bf16.msra.mxu0 0
  %645 = vmatpush.bf16.msra.mxu0 0
  %646 = vmatpush.bf16.msra.mxu0 0
  %647 = vmatpush.bf16.msra.mxu0 %v596
  %648 = vmatpush.bf16.msra.mxu0 %v592
  %649 = vmatpush.bf16.msra.mxu0 %v588
  %650 = vmatpush.bf16.msra.mxu0 %v584
  %651 = vmatmul.bf16.gmra.mxu0 %v615
  %v652 = vpop.f32.mrf.mxu0
  %v653 = vadd.f32 %v40, %v652
  %v654 = vpop.f32.mrf.mxu0
  %655 = vdwg.mxu0
  %656 = vmatpush.bf16.msra.mxu0 0
  %657 = vmatpush.bf16.msra.mxu0 0
  %658 = vmatpush.bf16.msra.mxu0 0
  %659 = vmatpush.bf16.msra.mxu0 0
  %660 = vmatpush.bf16.msra.mxu0 %v597
  %661 = vmatpush.bf16.msra.mxu0 %v593
  %662 = vmatpush.bf16.msra.mxu0 %v589
  %663 = vmatpush.bf16.msra.mxu0 %v585
  %664 = vmatmul.bf16.gmra.mxu0 %v615
  %v665 = vpop.f32.mrf.mxu0
  %v666 = vadd.f32 %v40, %v665
  %v667 = vpop.f32.mrf.mxu0
  %668 = vdwg.mxu0
  %v669 = vsub.f32 0.0, %v627
  %v670 = vsub.f32 0.0, %v640
  %v671 = vsub.f32 0.0, %v653
  %v672 = vsub.f32 0.0, %v666
  %v673 = vmul.f32 %v669, 1.442695
  %v674 = vpow.pop %v673
  %v675 = vmul.f32 %v670, 1.442695
  %v676 = vpow.pop %v675
  %v677 = vmul.f32 %v671, 1.442695
  %v678 = vpow.pop %v677
  %v679 = vmul.f32 %v672, 1.442695
  %v680 = vpow.pop %v679
  %v681 = vadd.f32 %v674, 1.0
  %v682 = vadd.f32 %v676, 1.0
  %v683 = vadd.f32 %v678, 1.0
  %v684 = vadd.f32 %v680, 1.0
  %v685 = vrcp.pop %v681
  %v686 = vmul.f32 %v681, %v685
  %v687 = vsub.f32 1.0, %v686
  %v688 = vmul.f32 %v685, %v687
  %v689 = vadd.f32 %v685, %v688
  %vm690 = vweird.f32 %v681
  %vm691 = vweird.f32 %v685
  %vm692 = vmor %vm690, %vm691
  %v693 = vsel %vm692, %v685, %v689
  %v694 = vand.u32 2147483647, %v681
  %vm695 = vcmp.eq.f32.partialorder %v694, 8.507059e+37
  %v696 = vand.u32 %v681, 2147483648
  %v697 = vor.u32 1.1754944e-38, %v696
  %v698 = vsel %vm695, %v697, %v693
  %v699 = vmul.f32 1.0, %v698
  %v700 = vrcp.pop %v682
  %v701 = vmul.f32 %v682, %v700
  %v702 = vsub.f32 1.0, %v701
  %v703 = vmul.f32 %v700, %v702
  %v704 = vadd.f32 %v700, %v703
  %vm705 = vweird.f32 %v682
  %vm706 = vweird.f32 %v700
  %vm707 = vmor %vm705, %vm706
  %v708 = vsel %vm707, %v700, %v704
  %v709 = vand.u32 2147483647, %v682
  %vm710 = vcmp.eq.f32.partialorder %v709, 8.507059e+37
  %v711 = vand.u32 %v682, 2147483648
  %v712 = vor.u32 1.1754944e-38, %v711
  %v713 = vsel %vm710, %v712, %v708
  %v714 = vmul.f32 1.0, %v713
  %v715 = vrcp.pop %v683
  %v716 = vmul.f32 %v683, %v715
  %v717 = vsub.f32 1.0, %v716
  %v718 = vmul.f32 %v715, %v717
  %v719 = vadd.f32 %v715, %v718
  %vm720 = vweird.f32 %v683
  %vm721 = vweird.f32 %v715
  %vm722 = vmor %vm720, %vm721
  %v723 = vsel %vm722, %v715, %v719
  %v724 = vand.u32 2147483647, %v683
  %vm725 = vcmp.eq.f32.partialorder %v724, 8.507059e+37
  %v726 = vand.u32 %v683, 2147483648
  %v727 = vor.u32 1.1754944e-38, %v726
  %v728 = vsel %vm725, %v727, %v723
  %v729 = vmul.f32 1.0, %v728
  %v730 = vrcp.pop %v684
  %v731 = vmul.f32 %v684, %v730
  %v732 = vsub.f32 1.0, %v731
  %v733 = vmul.f32 %v730, %v732
  %v734 = vadd.f32 %v730, %v733
  %vm735 = vweird.f32 %v684
  %vm736 = vweird.f32 %v730
  %vm737 = vmor %vm735, %vm736
  %v738 = vsel %vm737, %v730, %v734
  %v739 = vand.u32 2147483647, %v684
  %vm740 = vcmp.eq.f32.partialorder %v739, 8.507059e+37
  %v741 = vand.u32 %v684, 2147483648
  %v742 = vor.u32 1.1754944e-38, %v741
  %v743 = vsel %vm740, %v742, %v738
  %v744 = vmul.f32 1.0, %v743
  %v749 = vrot.slane %v714, 7
  %v750 = vrot.slane %v729, 6
  %v751 = vrot.slane %v744, 5
  %v752 = vsel %vm260, %v699, %v749
  %v753 = vsel %vm262, %v750, %v751
  %v754 = vsel %vm264, %v752, %v753
  %s756 = scalar_lea.vmem %s3, 8
  %757 = vst.msk [vmem:[%s756] sm:$0xf] %vm270, %v754
  %s758 = scalar_lea.vmem %s1, 3
  %v759 = vld [vmem:[%s758] sm:$0x1]
  %s760 = scalar_lea.vmem %s0, 384
  %v761 = vld [vmem:[%s760] sm:$0xff]
  %v762 = vld [vmem:[%s760 + $0x8] sm:$0xff]
  %v763 = vld [vmem:[%s760 + $0x10] sm:$0xff]
  %v764 = vld [vmem:[%s760 + $0x18] sm:$0xff]
  %v765 = vld [vmem:[%s760 + $0x20] sm:$0xff]
  %v766 = vld [vmem:[%s760 + $0x28] sm:$0xff]
  %v767 = vld [vmem:[%s760 + $0x30] sm:$0xff]
  %v768 = vld [vmem:[%s760 + $0x38] sm:$0xff]
  %v769 = vld [vmem:[%s760 + $0x40] sm:$0xff]
  %v770 = vld [vmem:[%s760 + $0x48] sm:$0xff]
  %v771 = vld [vmem:[%s760 + $0x50] sm:$0xff]
  %v772 = vld [vmem:[%s760 + $0x58] sm:$0xff]
  %v773 = vld [vmem:[%s760 + $0x60] sm:$0xff]
  %v774 = vld [vmem:[%s760 + $0x68] sm:$0xff]
  %v775 = vld [vmem:[%s760 + $0x70] sm:$0xff]
  %v776 = vld [vmem:[%s760 + $0x78] sm:$0xff]
  %v793 = vunpack.c.l.b16 %v761
  %v794 = vunpack.c.h.b16 %v761
  %v795 = vunpack.c.l.b16 %v762
  %v796 = vunpack.c.h.b16 %v762
  %v797 = vunpack.c.l.b16 %v763
  %v798 = vunpack.c.h.b16 %v763
  %v799 = vunpack.c.l.b16 %v764
  %v800 = vunpack.c.h.b16 %v764
  %v801 = vunpack.c.l.b16 %v765
  %v802 = vunpack.c.h.b16 %v765
  %v803 = vunpack.c.l.b16 %v766
  %v804 = vunpack.c.h.b16 %v766
  %v805 = vunpack.c.l.b16 %v767
  %v806 = vunpack.c.h.b16 %v767
  %v807 = vunpack.c.l.b16 %v768
  %v808 = vunpack.c.h.b16 %v768
  %v809 = vunpack.c.l.b16 %v769
  %v810 = vunpack.c.h.b16 %v769
  %v811 = vunpack.c.l.b16 %v770
  %v812 = vunpack.c.h.b16 %v770
  %v813 = vunpack.c.l.b16 %v771
  %v814 = vunpack.c.h.b16 %v771
  %v815 = vunpack.c.l.b16 %v772
  %v816 = vunpack.c.h.b16 %v772
  %v817 = vunpack.c.l.b16 %v773
  %v818 = vunpack.c.h.b16 %v773
  %v819 = vunpack.c.l.b16 %v774
  %v820 = vunpack.c.h.b16 %v774
  %v821 = vunpack.c.l.b16 %v775
  %v822 = vunpack.c.h.b16 %v775
  %v823 = vunpack.c.l.b16 %v776
  %v824 = vunpack.c.h.b16 %v776
  %v825 = vpack.c.b16 %v797, %v793
  %v826 = vpack.c.b16 %v798, %v794
  %v827 = vpack.c.b16 %v799, %v795
  %v828 = vpack.c.b16 %v800, %v796
  %v829 = vpack.c.b16 %v805, %v801
  %v830 = vpack.c.b16 %v806, %v802
  %v831 = vpack.c.b16 %v807, %v803
  %v832 = vpack.c.b16 %v808, %v804
  %v833 = vpack.c.b16 %v813, %v809
  %v834 = vpack.c.b16 %v814, %v810
  %v835 = vpack.c.b16 %v815, %v811
  %v836 = vpack.c.b16 %v816, %v812
  %v837 = vpack.c.b16 %v821, %v817
  %v838 = vpack.c.b16 %v822, %v818
  %v839 = vpack.c.b16 %v823, %v819
  %v840 = vpack.c.b16 %v824, %v820
  %v858 = vsel %vm121, %v759, 0
  %860 = vmatpush.bf16.msra.mxu0 0
  %861 = vmatpush.bf16.msra.mxu0 0
  %862 = vmatpush.bf16.msra.mxu0 0
  %863 = vmatpush.bf16.msra.mxu0 0
  %864 = vmatpush.bf16.msra.mxu0 %v837
  %865 = vmatpush.bf16.msra.mxu0 %v833
  %866 = vmatpush.bf16.msra.mxu0 %v829
  %867 = vmatpush.bf16.msra.mxu0 %v825
  %868 = vmatmul.bf16.gmra.mxu0 %v858
  %v869 = vpop.f32.mrf.mxu0
  %v870 = vadd.f32 %v40, %v869
  %v871 = vpop.f32.mrf.mxu0
  %872 = vdwg.mxu0
  %873 = vmatpush.bf16.msra.mxu0 0
  %874 = vmatpush.bf16.msra.mxu0 0
  %875 = vmatpush.bf16.msra.mxu0 0
  %876 = vmatpush.bf16.msra.mxu0 0
  %877 = vmatpush.bf16.msra.mxu0 %v838
  %878 = vmatpush.bf16.msra.mxu0 %v834
  %879 = vmatpush.bf16.msra.mxu0 %v830
  %880 = vmatpush.bf16.msra.mxu0 %v826
  %881 = vmatmul.bf16.gmra.mxu0 %v858
  %v882 = vpop.f32.mrf.mxu0
  %v883 = vadd.f32 %v40, %v882
  %v884 = vpop.f32.mrf.mxu0
  %885 = vdwg.mxu0
  %886 = vmatpush.bf16.msra.mxu0 0
  %887 = vmatpush.bf16.msra.mxu0 0
  %888 = vmatpush.bf16.msra.mxu0 0
  %889 = vmatpush.bf16.msra.mxu0 0
  %890 = vmatpush.bf16.msra.mxu0 %v839
  %891 = vmatpush.bf16.msra.mxu0 %v835
  %892 = vmatpush.bf16.msra.mxu0 %v831
  %893 = vmatpush.bf16.msra.mxu0 %v827
  %894 = vmatmul.bf16.gmra.mxu0 %v858
  %v895 = vpop.f32.mrf.mxu0
  %v896 = vadd.f32 %v40, %v895
  %v897 = vpop.f32.mrf.mxu0
  %898 = vdwg.mxu0
  %899 = vmatpush.bf16.msra.mxu0 0
  %900 = vmatpush.bf16.msra.mxu0 0
  %901 = vmatpush.bf16.msra.mxu0 0
  %902 = vmatpush.bf16.msra.mxu0 0
  %903 = vmatpush.bf16.msra.mxu0 %v840
  %904 = vmatpush.bf16.msra.mxu0 %v836
  %905 = vmatpush.bf16.msra.mxu0 %v832
  %906 = vmatpush.bf16.msra.mxu0 %v828
  %907 = vmatmul.bf16.gmra.mxu0 %v858
  %v908 = vpop.f32.mrf.mxu0
  %v909 = vadd.f32 %v40, %v908
  %v910 = vpop.f32.mrf.mxu0
  %911 = vdwg.mxu0
  %v912 = vsub.f32 0.0, %v870
  %v913 = vsub.f32 0.0, %v883
  %v914 = vsub.f32 0.0, %v896
  %v915 = vsub.f32 0.0, %v909
  %v916 = vmul.f32 %v912, 1.442695
  %v917 = vpow.pop %v916
  %v918 = vmul.f32 %v913, 1.442695
  %v919 = vpow.pop %v918
  %v920 = vmul.f32 %v914, 1.442695
  %v921 = vpow.pop %v920
  %v922 = vmul.f32 %v915, 1.442695
  %v923 = vpow.pop %v922
  %v924 = vadd.f32 %v917, 1.0
  %v925 = vadd.f32 %v919, 1.0
  %v926 = vadd.f32 %v921, 1.0
  %v927 = vadd.f32 %v923, 1.0
  %v928 = vrcp.pop %v924
  %v929 = vmul.f32 %v924, %v928
  %v930 = vsub.f32 1.0, %v929
  %v931 = vmul.f32 %v928, %v930
  %v932 = vadd.f32 %v928, %v931
  %vm933 = vweird.f32 %v924
  %vm934 = vweird.f32 %v928
  %vm935 = vmor %vm933, %vm934
  %v936 = vsel %vm935, %v928, %v932
  %v937 = vand.u32 2147483647, %v924
  %vm938 = vcmp.eq.f32.partialorder %v937, 8.507059e+37
  %v939 = vand.u32 %v924, 2147483648
  %v940 = vor.u32 1.1754944e-38, %v939
  %v941 = vsel %vm938, %v940, %v936
  %v942 = vmul.f32 1.0, %v941
  %v943 = vrcp.pop %v925
  %v944 = vmul.f32 %v925, %v943
  %v945 = vsub.f32 1.0, %v944
  %v946 = vmul.f32 %v943, %v945
  %v947 = vadd.f32 %v943, %v946
  %vm948 = vweird.f32 %v925
  %vm949 = vweird.f32 %v943
  %vm950 = vmor %vm948, %vm949
  %v951 = vsel %vm950, %v943, %v947
  %v952 = vand.u32 2147483647, %v925
  %vm953 = vcmp.eq.f32.partialorder %v952, 8.507059e+37
  %v954 = vand.u32 %v925, 2147483648
  %v955 = vor.u32 1.1754944e-38, %v954
  %v956 = vsel %vm953, %v955, %v951
  %v957 = vmul.f32 1.0, %v956
  %v958 = vrcp.pop %v926
  %v959 = vmul.f32 %v926, %v958
  %v960 = vsub.f32 1.0, %v959
  %v961 = vmul.f32 %v958, %v960
  %v962 = vadd.f32 %v958, %v961
  %vm963 = vweird.f32 %v926
  %vm964 = vweird.f32 %v958
  %vm965 = vmor %vm963, %vm964
  %v966 = vsel %vm965, %v958, %v962
  %v967 = vand.u32 2147483647, %v926
  %vm968 = vcmp.eq.f32.partialorder %v967, 8.507059e+37
  %v969 = vand.u32 %v926, 2147483648
  %v970 = vor.u32 1.1754944e-38, %v969
  %v971 = vsel %vm968, %v970, %v966
  %v972 = vmul.f32 1.0, %v971
  %v973 = vrcp.pop %v927
  %v974 = vmul.f32 %v927, %v973
  %v975 = vsub.f32 1.0, %v974
  %v976 = vmul.f32 %v973, %v975
  %v977 = vadd.f32 %v973, %v976
  %vm978 = vweird.f32 %v927
  %vm979 = vweird.f32 %v973
  %vm980 = vmor %vm978, %vm979
  %v981 = vsel %vm980, %v973, %v977
  %v982 = vand.u32 2147483647, %v927
  %vm983 = vcmp.eq.f32.partialorder %v982, 8.507059e+37
  %v984 = vand.u32 %v927, 2147483648
  %v985 = vor.u32 1.1754944e-38, %v984
  %v986 = vsel %vm983, %v985, %v981
  %v987 = vmul.f32 1.0, %v986
  %v992 = vrot.slane %v957, 7
  %v993 = vrot.slane %v972, 6
  %v994 = vrot.slane %v987, 5
  %v995 = vsel %vm260, %v942, %v992
  %v996 = vsel %vm262, %v993, %v994
  %v997 = vsel %vm264, %v995, %v996
  %s999 = scalar_lea.vmem %s3, 12
  %1000 = vst.msk [vmem:[%s999] sm:$0xf] %vm270, %v997
  // Predicated region
  $region14: #{decoder_forward.5} parent=0 // pred_check
    _
  $region15: #{decoder_forward.5} parent=0 // pred_check_branch
    %1002 = sbr.rel (0) target = $region17
  $region16: #{decoder_forward.5} parent=0 // pred_region
    _
  $region17: #{decoder_forward.5} parent=0 // pred_fallthru
    _
  // Predicated region
  $region18: #{decoder_forward.5} parent=0 // pred_check
    _
  $region19: #{decoder_forward.5} parent=0 // pred_check_branch
    %1004 = sbr.rel (0) target = $region21
  $region20: #{decoder_forward.5} parent=0 // pred_region
    _
  $region21: #{decoder_forward.5} parent=0 // pred_fallthru
    _

</llo_original>
